<compile_context>
chip_gen: v7x
topology: tpu7x:2x2x1
jax: 0.10.0
libtpu: 0.0.40
codegen_flags: <defaults>
</compile_context>

<pallas_src>
import functools

import jax
import jax.numpy as jnp
from jax.experimental import pallas as pl
from jax.experimental.pallas import tpu as pltpu


def _make_pinn_kernel(input_dim, out_dim, use_bf16):
    """Build the whole-MLP-forward kernel body for one batch tile.

    Ref layout (batch on lanes):
      xt_ref            : (input_dim, TN)   stacked feature rows
      w_in_col[j]       : (HID, 1)          j-th column of layer_in weight
      b_in              : (HID, 1)
      w_m0, b_m0        : (HID, HID), (HID, 1)
      w_m1, b_m1        : (HID, HID), (HID, 1)
      w_out             : (HID, 1)  if out_dim == 1 (transposed; VPU/XLU path)
                          (OUT, HID) otherwise      (MXU path)
      b_out             : (OUT, 1)
      o_ref             : (OUT, TN)
    """
    hi_prec = jax.lax.Precision.HIGHEST

    def middle_layer(w_ref, b_ref, h):
        if use_bf16:
            # bf16 dot inputs, f32 accumulate: cuts MXU pass count vs f32-in dots.
            pre = jnp.dot(w_ref[...].astype(jnp.bfloat16),
                          h.astype(jnp.bfloat16),
                          preferred_element_type=jnp.float32)
        else:
            # Pinned precision: faithful to the f32 PyTorch reference.
            pre = jnp.dot(w_ref[...], h,
                          preferred_element_type=jnp.float32,
                          precision=hi_prec)
        return jnp.tanh(pre + b_ref[...])                      # (HID, TN)

    def kernel(*refs):
        xt_ref = refs[0]
        w_in_cols = refs[1:1 + input_dim]
        (b_in_ref, w_m0_ref, b_m0_ref, w_m1_ref, b_m1_ref,
         w_out_ref, b_out_ref, o_ref) = refs[1 + input_dim:]

        # Layer 1 on the VPU: per-feature (HID,1)*(1,TN) broadcast FMAs.
        pre = b_in_ref[...] + w_in_cols[0][...] * xt_ref[0:1, :]
        for j in range(1, input_dim):
            pre = pre + w_in_cols[j][...] * xt_ref[j:j + 1, :]
        h = jnp.tanh(pre)                                      # (HID, TN)

        h = middle_layer(w_m0_ref, b_m0_ref, h)                # (HID, TN)
        h = middle_layer(w_m1_ref, b_m1_ref, h)                # (HID, TN)

        if out_dim == 1:
            # Output layer off the MXU: VPU mul + XLU sublane reduce.
            logits = jnp.sum(w_out_ref[...] * h, axis=0, keepdims=True)
        else:
            logits = jnp.dot(w_out_ref[...], h,
                             preferred_element_type=jnp.float32,
                             precision=hi_prec)
        o_ref[...] = (logits + b_out_ref[...]).astype(o_ref.dtype)  # (OUT, TN)

    return kernel


def _round_up(n, m):
    return ((n + m - 1) // m) * m


def _choose_tiling(n):
    """Pick (n_pad, tile_n).

    Batch is padded to a multiple of 256 so we can always have an even number
    (>= 2) of 128-multiple tiles; the tile is the largest candidate <= 2048 that
    divides n_pad with an even step count (amortizes per-step overhead while
    keeping the (HID, TN) f32 intermediate from forcing spill-store dominance).
    """
    n_pad = max(_round_up(n, 256), 256)
    for tile in (2048, 1024, 512, 256, 128):
        steps = n_pad // tile
        if n_pad % tile == 0 and steps >= 2 and steps % 2 == 0:
            return n_pad, tile
    for tile in (2048, 1024, 512, 256, 128):
        steps = n_pad // tile
        if n_pad % tile == 0 and steps >= 2:
            return n_pad, tile
    return n_pad, 128  # unreachable: 128 always divides a multiple of 256


@functools.partial(jax.jit, static_argnames=("tile_n", "n_pad", "use_bf16"))
def _pinn_forward_jit(x, t, params, tile_n, n_pad, use_bf16):
    n = x.shape[0]
    input_dim = params["w_in"].shape[1]
    out_dim = params["w_out"].shape[0]
    assert n_pad % tile_n == 0 and n_pad >= n
    grid_steps = n_pad // tile_n

    # Batch-on-lanes: stack the (N,1) feature columns into one (IN, N) slab
    # (single aligned feature block per grid step) and zero-pad the batch.
    feats = jnp.concatenate([x.reshape(1, n), t.reshape(1, n)], axis=0)
    feats = jnp.pad(feats, ((0, 0), (0, n_pad - n)))

    # Pre-split layer_in weight into per-feature (HID, 1) columns: the kernel
    # never lane-slices the (HID, IN) ref or re-materializes broadcasts.
    w_in_cols = [params["w_in"][:, j:j + 1] for j in range(input_dim)]

    # Pre-transpose layer_out weight for the VPU/XLU output path.
    w_out_arg = params["w_out"].T if out_dim == 1 else params["w_out"]

    weight_args = w_in_cols + [
        params["b_in"],
        params["w_m0"], params["b_m0"],
        params["w_m1"], params["b_m1"],
        w_out_arg, params["b_out"],
    ]

    def full_spec(arr):
        # Whole-array block, same block every grid step -> stays VMEM-resident.
        ndim = arr.ndim
        return pl.BlockSpec(arr.shape, lambda i, _nd=ndim: (0,) * _nd)

    feat_spec = pl.BlockSpec((input_dim, tile_n), lambda i: (0, i))

    out = pl.pallas_call(
        _make_pinn_kernel(input_dim, out_dim, use_bf16),
        out_shape=jax.ShapeDtypeStruct((out_dim, n_pad), jnp.float32),
        grid_spec=pltpu.PrefetchScalarGridSpec(
            num_scalar_prefetch=0,
            grid=(grid_steps,),
            in_specs=[feat_spec] + [full_spec(a) for a in weight_args],
            out_specs=pl.BlockSpec((out_dim, tile_n), lambda i: (0, i)),
        ),
        compiler_params=pltpu.CompilerParams(
            dimension_semantics=("parallel",)),
    )(feats, *weight_args)

    # (OUT, n_pad): drop batch padding, transpose back to PyTorch (N, OUT).
    return out[:, :n].T


def pinn_forward(x, t, params, *, tile_n=None, use_bf16=False):
    """JAX wrapper matching PINN.forward(x, t) for the input=2 configuration."""
    n = x.shape[0]
    if tile_n is None:
        n_pad, tile_n = _choose_tiling(n)
    else:
        assert tile_n % 128 == 0, "tile_n must be a multiple of 128"
        n_pad = _round_up(n, tile_n)
    return _pinn_forward_jit(x, t, params, tile_n, n_pad, use_bf16)


def init_pinn_params(key, input_dim, output_dim, dim_hidden):
    """Deterministic init mimicking nn.Linear's U(-1/sqrt(fan_in), 1/sqrt(fan_in)).

    Weights stored in PyTorch layout (out_features, in_features); biases (out, 1).
    num_hidden=3 -> exactly 2 middle layers (matches the module default).
    """
    def linear(k, fan_in, fan_out):
        kw, kb = jax.random.split(k)
        bound = 1.0 / jnp.sqrt(fan_in)
        w = jax.random.uniform(kw, (fan_out, fan_in), jnp.float32, -bound, bound)
        b = jax.random.uniform(kb, (fan_out, 1), jnp.float32, -bound, bound)
        return w, b

    k0, k1, k2, k3 = jax.random.split(key, 4)
    w_in, b_in = linear(k0, input_dim, dim_hidden)
    w_m0, b_m0 = linear(k1, dim_hidden, dim_hidden)
    w_m1, b_m1 = linear(k2, dim_hidden, dim_hidden)
    w_out, b_out = linear(k3, dim_hidden, output_dim)
    return dict(w_in=w_in, b_in=b_in, w_m0=w_m0, b_m0=b_m0,
                w_m1=w_m1, b_m1=b_m1, w_out=w_out, b_out=b_out)


def pinn_forward_ref(x, t, params):
    """Pure-JAX reference matching the f32 PyTorch forward (batch on rows)."""
    hp = jax.lax.Precision.HIGHEST
    h = jnp.concatenate([x, t], axis=1)
    h = jnp.tanh(jnp.dot(h, params["w_in"].T, precision=hp) + params["b_in"][:, 0])
    h = jnp.tanh(jnp.dot(h, params["w_m0"].T, precision=hp) + params["b_m0"][:, 0])
    h = jnp.tanh(jnp.dot(h, params["w_m1"].T, precision=hp) + params["b_m1"][:, 0])
    return jnp.dot(h, params["w_out"].T, precision=hp) + params["b_out"][:, 0]


if __name__ == "__main__":
    # Small shapes consistent with the module: input=2 features, output=1,
    # num_hidden=3 (=> 2 middle layers), dim_hidden=32, batch=128.
    INPUT_DIM, OUTPUT_DIM, DIM_HIDDEN, BATCH = 2, 1, 32, 128

    key = jax.random.PRNGKey(0)
    kp, kx, kt = jax.random.split(key, 3)
    params = init_pinn_params(kp, INPUT_DIM, OUTPUT_DIM, DIM_HIDDEN)

    x = jax.random.normal(kx, (BATCH, 1), dtype=jnp.float32)
    t = jax.random.normal(kt, (BATCH, 1), dtype=jnp.float32)

    ref = jax.block_until_ready(pinn_forward_ref(x, t, params))

    # Default f32 path (pinned HIGHEST precision) -- must match reference tightly.
    out = jax.block_until_ready(pinn_forward(x, t, params))
    assert out.shape == (BATCH, OUTPUT_DIM)
    assert jnp.allclose(out, ref, atol=1e-5, rtol=1e-5), "mismatch vs JAX reference"

    # Opt-in bf16-matmul path (MXU pass reduction; accuracy tradeoff -> loose tol).
    out_bf16 = jax.block_until_ready(pinn_forward(x, t, params, use_bf16=True))
    assert out_bf16.shape == (BATCH, OUTPUT_DIM)
    assert bool(jnp.all(jnp.isfinite(out_bf16)))
    assert float(jnp.max(jnp.abs(out_bf16 - ref))) < 1e-1, "bf16 path diverged"

    print("KERNEL_OK")
</pallas_src>

<mosaic_0001>
module attributes {stable_mosaic.version = 11 : i64} {
  func.func @kernel(%arg0: i32, %arg1: memref<2x128xf32, #tpu.memory_space<vmem>>, %arg2: memref<32x1xf32, #tpu.memory_space<vmem>>, %arg3: memref<32x1xf32, #tpu.memory_space<vmem>>, %arg4: memref<32x1xf32, #tpu.memory_space<vmem>>, %arg5: memref<32x32xf32, #tpu.memory_space<vmem>>, %arg6: memref<32x1xf32, #tpu.memory_space<vmem>>, %arg7: memref<32x32xf32, #tpu.memory_space<vmem>>, %arg8: memref<32x1xf32, #tpu.memory_space<vmem>>, %arg9: memref<32x1xf32, #tpu.memory_space<vmem>>, %arg10: memref<1x1xf32, #tpu.memory_space<vmem>>, %arg11: memref<1x128xf32, #tpu.memory_space<vmem>>) attributes {dimension_semantics = [#tpu.dimension_semantics<parallel>], iteration_bounds = array<i64: 2>, scalar_prefetch = 0 : i64, scratch_operands = 0 : i64, tpu.core_type = #tpu.core_type<tc>, window_params = [{transform_indices = @transform_0, window_bounds = array<i64: 2, 128>}, {pipeline_mode = #tpu.pipeline_mode<synchronous>, transform_indices = @transform_1, window_bounds = array<i64: 32, 1>}, {pipeline_mode = #tpu.pipeline_mode<synchronous>, transform_indices = @transform_2, window_bounds = array<i64: 32, 1>}, {pipeline_mode = #tpu.pipeline_mode<synchronous>, transform_indices = @transform_3, window_bounds = array<i64: 32, 1>}, {pipeline_mode = #tpu.pipeline_mode<synchronous>, transform_indices = @transform_4, window_bounds = array<i64: 32, 32>}, {pipeline_mode = #tpu.pipeline_mode<synchronous>, transform_indices = @transform_5, window_bounds = array<i64: 32, 1>}, {pipeline_mode = #tpu.pipeline_mode<synchronous>, transform_indices = @transform_6, window_bounds = array<i64: 32, 32>}, {pipeline_mode = #tpu.pipeline_mode<synchronous>, transform_indices = @transform_7, window_bounds = array<i64: 32, 1>}, {pipeline_mode = #tpu.pipeline_mode<synchronous>, transform_indices = @transform_8, window_bounds = array<i64: 32, 1>}, {pipeline_mode = #tpu.pipeline_mode<synchronous>, transform_indices = @transform_9, window_bounds = array<i64: 1, 1>}, {transform_indices = @transform_10, window_bounds = array<i64: 1, 128>}]} {
    %c0 = arith.constant 0 : index
    %c0_0 = arith.constant 0 : index
    %0 = vector.load %arg4[%c0, %c0_0] : memref<32x1xf32, #tpu.memory_space<vmem>>, vector<32x1xf32>
    %c0_1 = arith.constant 0 : index
    %c0_2 = arith.constant 0 : index
    %1 = vector.load %arg2[%c0_1, %c0_2] : memref<32x1xf32, #tpu.memory_space<vmem>>, vector<32x1xf32>
    %c0_3 = arith.constant 0 : index
    %c0_4 = arith.constant 0 : index
    %2 = vector.load %arg1[%c0_3, %c0_4] : memref<2x128xf32, #tpu.memory_space<vmem>>, vector<1x128xf32>
    %3 = vector.broadcast %1 : vector<32x1xf32> to vector<32x128xf32>
    %4 = vector.broadcast %2 : vector<1x128xf32> to vector<32x128xf32>
    %5 = arith.mulf %3, %4 : vector<32x128xf32>
    %6 = vector.broadcast %0 : vector<32x1xf32> to vector<32x128xf32>
    %7 = arith.addf %6, %5 : vector<32x128xf32>
    %c0_5 = arith.constant 0 : index
    %c0_6 = arith.constant 0 : index
    %8 = vector.load %arg3[%c0_5, %c0_6] : memref<32x1xf32, #tpu.memory_space<vmem>>, vector<32x1xf32>
    %c1 = arith.constant 1 : index
    %c0_7 = arith.constant 0 : index
    %9 = vector.load %arg1[%c1, %c0_7] : memref<2x128xf32, #tpu.memory_space<vmem>>, vector<1x128xf32>
    %10 = vector.broadcast %8 : vector<32x1xf32> to vector<32x128xf32>
    %11 = vector.broadcast %9 : vector<1x128xf32> to vector<32x128xf32>
    %12 = arith.mulf %10, %11 : vector<32x128xf32>
    %13 = arith.addf %7, %12 : vector<32x128xf32>
    %14 = math.tanh %13 : vector<32x128xf32>
    %c0_8 = arith.constant 0 : index
    %c0_9 = arith.constant 0 : index
    %15 = vector.load %arg5[%c0_8, %c0_9] : memref<32x32xf32, #tpu.memory_space<vmem>>, vector<32x32xf32>
    %cst = arith.constant dense<0.000000e+00> : vector<32x128xf32>
    %16 = tpu.matmul %15, %14, %cst {dimension_numbers = #tpu.dot_dimension_numbers<[1], [0], [0], [1], [0, 0, 1, 1], [], []>, precision = #tpu.contract_precision<fp32>} : vector<32x32xf32>, vector<32x128xf32>, vector<32x128xf32> -> vector<32x128xf32>
    %c0_10 = arith.constant 0 : index
    %c0_11 = arith.constant 0 : index
    %17 = vector.load %arg6[%c0_10, %c0_11] : memref<32x1xf32, #tpu.memory_space<vmem>>, vector<32x1xf32>
    %18 = vector.broadcast %17 : vector<32x1xf32> to vector<32x128xf32>
    %19 = arith.addf %16, %18 : vector<32x128xf32>
    %20 = math.tanh %19 : vector<32x128xf32>
    %c0_12 = arith.constant 0 : index
    %c0_13 = arith.constant 0 : index
    %21 = vector.load %arg7[%c0_12, %c0_13] : memref<32x32xf32, #tpu.memory_space<vmem>>, vector<32x32xf32>
    %cst_14 = arith.constant dense<0.000000e+00> : vector<32x128xf32>
    %22 = tpu.matmul %21, %20, %cst_14 {dimension_numbers = #tpu.dot_dimension_numbers<[1], [0], [0], [1], [0, 0, 1, 1], [], []>, precision = #tpu.contract_precision<fp32>} : vector<32x32xf32>, vector<32x128xf32>, vector<32x128xf32> -> vector<32x128xf32>
    %c0_15 = arith.constant 0 : index
    %c0_16 = arith.constant 0 : index
    %23 = vector.load %arg8[%c0_15, %c0_16] : memref<32x1xf32, #tpu.memory_space<vmem>>, vector<32x1xf32>
    %24 = vector.broadcast %23 : vector<32x1xf32> to vector<32x128xf32>
    %25 = arith.addf %22, %24 : vector<32x128xf32>
    %26 = math.tanh %25 : vector<32x128xf32>
    %c0_17 = arith.constant 0 : index
    %c0_18 = arith.constant 0 : index
    %27 = vector.load %arg9[%c0_17, %c0_18] : memref<32x1xf32, #tpu.memory_space<vmem>>, vector<32x1xf32>
    %28 = vector.broadcast %27 : vector<32x1xf32> to vector<32x128xf32>
    %29 = arith.mulf %28, %26 : vector<32x128xf32>
    %cst_19 = arith.constant dense<0.000000e+00> : vector<128xf32>
    %30 = vector.multi_reduction <add>, %29, %cst_19 [0] : vector<32x128xf32> to vector<128xf32>
    %31 = vector.shape_cast %30 : vector<128xf32> to vector<1x128xf32>
    %c0_20 = arith.constant 0 : index
    %c0_21 = arith.constant 0 : index
    %32 = vector.load %arg10[%c0_20, %c0_21] : memref<1x1xf32, #tpu.memory_space<vmem>>, vector<1x1xf32>
    %33 = vector.broadcast %32 : vector<1x1xf32> to vector<1x128xf32>
    %34 = arith.addf %31, %33 : vector<1x128xf32>
    %c0_22 = arith.constant 0 : index
    %c0_23 = arith.constant 0 : index
    %35 = vector.load %arg11[%c0_22, %c0_23] : memref<1x128xf32, #tpu.memory_space<vmem>>, vector<1x128xf32>
    tpu.vector_store %arg11[%c0_22, %c0_23], %34 {strides = array<i32>} : memref<1x128xf32, #tpu.memory_space<vmem>>, vector<1x128xf32>,
    return
  }
  func.func @transform_0(%arg0: i32) -> (i32, i32) {
    %c0_i32 = arith.constant 0 : i32
    %c0_i32_0 = arith.constant 0 : i32
    return %c0_i32, %arg0 : i32, i32
  }
  func.func @transform_1(%arg0: i32) -> (i32, i32) {
    %c0_i32 = arith.constant 0 : i32
    %c0_i32_0 = arith.constant 0 : i32
    %c0_i32_1 = arith.constant 0 : i32
    return %c0_i32, %c0_i32_0 : i32, i32
  }
  func.func @transform_2(%arg0: i32) -> (i32, i32) {
    %c0_i32 = arith.constant 0 : i32
    %c0_i32_0 = arith.constant 0 : i32
    %c0_i32_1 = arith.constant 0 : i32
    return %c0_i32, %c0_i32_0 : i32, i32
  }
  func.func @transform_3(%arg0: i32) -> (i32, i32) {
    %c0_i32 = arith.constant 0 : i32
    %c0_i32_0 = arith.constant 0 : i32
    %c0_i32_1 = arith.constant 0 : i32
    return %c0_i32, %c0_i32_0 : i32, i32
  }
  func.func @transform_4(%arg0: i32) -> (i32, i32) {
    %c0_i32 = arith.constant 0 : i32
    %c0_i32_0 = arith.constant 0 : i32
    %c0_i32_1 = arith.constant 0 : i32
    return %c0_i32, %c0_i32_0 : i32, i32
  }
  func.func @transform_5(%arg0: i32) -> (i32, i32) {
    %c0_i32 = arith.constant 0 : i32
    %c0_i32_0 = arith.constant 0 : i32
    %c0_i32_1 = arith.constant 0 : i32
    return %c0_i32, %c0_i32_0 : i32, i32
  }
  func.func @transform_6(%arg0: i32) -> (i32, i32) {
    %c0_i32 = arith.constant 0 : i32
    %c0_i32_0 = arith.constant 0 : i32
    %c0_i32_1 = arith.constant 0 : i32
    return %c0_i32, %c0_i32_0 : i32, i32
  }
  func.func @transform_7(%arg0: i32) -> (i32, i32) {
    %c0_i32 = arith.constant 0 : i32
    %c0_i32_0 = arith.constant 0 : i32
    %c0_i32_1 = arith.constant 0 : i32
    return %c0_i32, %c0_i32_0 : i32, i32
  }
  func.func @transform_8(%arg0: i32) -> (i32, i32) {
    %c0_i32 = arith.constant 0 : i32
    %c0_i32_0 = arith.constant 0 : i32
    %c0_i32_1 = arith.constant 0 : i32
    return %c0_i32, %c0_i32_0 : i32, i32
  }
  func.func @transform_9(%arg0: i32) -> (i32, i32) {
    %c0_i32 = arith.constant 0 : i32
    %c0_i32_0 = arith.constant 0 : i32
    %c0_i32_1 = arith.constant 0 : i32
    return %c0_i32, %c0_i32_0 : i32, i32
  }
  func.func @transform_10(%arg0: i32) -> (i32, i32) {
    %c0_i32 = arith.constant 0 : i32
    %c0_i32_0 = arith.constant 0 : i32
    return %c0_i32, %arg0 : i32, i32
  }
}

</mosaic_0001>

<llo_original>
// kernel: _pinn_forward_jit.1
$region0: #{_pinn_forward_jit.1}
  #allocation0 [shape = 'u32[]', space=smem, size = 0x4, offset = 0x4, fixed_abs, tag = 'smem constant byte address 0x4 - core index']
  #allocation1 [shape = 'u32[144,128]{1,0:T(1,128)}', space=vmem, size = 0x12000, scoped, tag = 'internal scratch']
  #allocation2 [shape = 'f32[1,1]{1,0:T(1,128)S(1)}', space=vmem, size = 0x200, scoped, tag = 'scoped memory for _pinn_forward_jit.1']
  %s0 = inlined_call_operand.vmem [shape: f32[2,256], index: 0, kind: input, shape index: {}]
  %s1 = inlined_call_operand.vmem [shape: f32[32,1], index: 1, kind: input, shape index: {}]
  %s2 = inlined_call_operand.vmem [shape: f32[32,1], index: 2, kind: input, shape index: {}]
  %s3 = inlined_call_operand.vmem [shape: f32[32,1], index: 3, kind: input, shape index: {}]
  %s4 = inlined_call_operand.vmem [shape: f32[32,32], index: 4, kind: input, shape index: {}]
  %s5 = inlined_call_operand.vmem [shape: f32[32,1], index: 5, kind: input, shape index: {}]
  %s6 = inlined_call_operand.vmem [shape: f32[32,32], index: 6, kind: input, shape index: {}]
  %s7 = inlined_call_operand.vmem [shape: f32[32,1], index: 7, kind: input, shape index: {}]
  %s8 = inlined_call_operand.vmem [shape: f32[32,1], index: 8, kind: input, shape index: {}]
  %s9 = inlined_call_operand.<no memory space> [shape: f32[1,1], index: 9, kind: input, shape index: {}]
  %s10 = inlined_call_operand.vmem [shape: f32[1,256], index: 10, kind: output, shape index: {}]
  %s11 = sld [smem:[#allocation0]]
  $region73: #{_pinn_forward_jit.1} parent=0
    _
  %s13 = ssub.s32 1, %s11
  %s14 = scalar_select 0, %s13, %s11
  %v15 = vstv %s9
  %16 = vst [vmem:[#allocation2] sm:$0x1] %v15
  loop: start=0, step=1, limit=4
  $region2: #{_pinn_forward_jit.1} parent=0 // loop_pre_header
    _
  $region3: #{_pinn_forward_jit.1} parent=0 // loop_header
    %s18 = sphi 0, %s22
    %p19 = scmp.ge.s32.totalorder %s18, 4
    %s28 = sphi 0, %s30
    %s31 = sphi 0, %s28
    %s32 = sphi 0, %s31
    %s48 = sphi 0, %s32
    %s52 = sphi 0, %s52
    %s54 = sphi 0, %s52
    %s55 = sphi 0, %s54
    %s69 = sphi 0, %s55
    %s73 = sphi 0, %s73
    %s75 = sphi 0, %s73
    %s76 = sphi 0, %s75
    %s90 = sphi 0, %s76
    %s94 = sphi 0, %s94
    %s96 = sphi 0, %s94
    %s97 = sphi 0, %s96
    %s111 = sphi 0, %s97
    %s115 = sphi 0, %s115
    %s117 = sphi 0, %s115
    %s118 = sphi 0, %s117
    %s132 = sphi 0, %s118
    %s136 = sphi 0, %s136
    %s138 = sphi 0, %s136
    %s139 = sphi 0, %s138
    %s153 = sphi 0, %s139
    %s157 = sphi 0, %s157
    %s159 = sphi 0, %s157
    %s160 = sphi 0, %s159
    %s174 = sphi 0, %s160
    %s178 = sphi 0, %s178
    %s180 = sphi 0, %s178
    %s181 = sphi 0, %s180
    %s195 = sphi 0, %s181
    %s199 = sphi 0, %s199
    %s201 = sphi 0, %s199
    %s202 = sphi 0, %s201
    %s216 = sphi 0, %s202
    %s220 = sphi 0, %s220
    %s222 = sphi 0, %s220
    %s223 = sphi 0, %s222
    %s237 = sphi 0, %s223
    %s243 = sphi 0, %s245
    %s246 = sphi 0, %s243
    %s247 = sphi 0, %s246
    %s263 = sphi 0, %s247
  $region4: #{_pinn_forward_jit.1} parent=0 // loop_header_branch
    %21 = sbr.rel (%p19) target = $region8
  $region5: #{_pinn_forward_jit.1} parent=0 // loop_body
    %s23 = ssub.s32 %s18, 1
    %s24 = ssub.s32 %s18, 2
    %s25 = sadd.s32 %s18, 1
    %s26 = ssub.s32 %s18, %s25
    %p27 = scmp.eq.s32.totalorder %s26, 0
    %s29 = sadd.s32 %s28, 1
    %s30 = scalar_select %p27, %s28, %s29
    %p33 = pneg %p27
    %p34 = scmp.eq.s32.totalorder %s18, 1
    %p35 = por %p33, %p34
    %p36 = scmp.ne.s32.totalorder %s28, %s31
    %p37 = scmp.eq.s32.totalorder %s18, 0
    %p38 = por %p36, %p37
    %p39 = scmp.ne.s32.totalorder %s28, %s31
    %p40 = scmp.eq.s32.totalorder %s23, 1
    %p41 = por %p39, %p40
    %p42 = scmp.ne.s32.totalorder %s31, %s32
    %p43 = scmp.eq.s32.totalorder %s23, 0
    %p44 = por %p42, %p43
    %p45 = scmp.ne.s32.totalorder %s31, %s32
    %p46 = scmp.eq.s32.totalorder %s24, 1
    %p47 = por %p45, %p46
    %p49 = scmp.ne.s32.totalorder %s32, %s48
    %p50 = scmp.eq.s32.totalorder %s24, 0
    %p51 = por %p49, %p50
    %s53 = sadd.s32 %s52, 1
    %p56 = scmp.eq.s32.totalorder %s18, 1
    %p57 = scmp.ne.s32.totalorder %s52, %s54
    %p58 = scmp.eq.s32.totalorder %s18, 0
    %p59 = por %p57, %p58
    %p60 = scmp.ne.s32.totalorder %s52, %s54
    %p61 = scmp.eq.s32.totalorder %s23, 1
    %p62 = por %p60, %p61
    %p63 = scmp.ne.s32.totalorder %s54, %s55
    %p64 = scmp.eq.s32.totalorder %s23, 0
    %p65 = por %p63, %p64
    %p66 = scmp.ne.s32.totalorder %s54, %s55
    %p67 = scmp.eq.s32.totalorder %s24, 1
    %p68 = por %p66, %p67
    %p70 = scmp.ne.s32.totalorder %s55, %s69
    %p71 = scmp.eq.s32.totalorder %s24, 0
    %p72 = por %p70, %p71
    %s74 = sadd.s32 %s73, 1
    %p77 = scmp.eq.s32.totalorder %s18, 1
    %p78 = scmp.ne.s32.totalorder %s73, %s75
    %p79 = scmp.eq.s32.totalorder %s18, 0
    %p80 = por %p78, %p79
    %p81 = scmp.ne.s32.totalorder %s73, %s75
    %p82 = scmp.eq.s32.totalorder %s23, 1
    %p83 = por %p81, %p82
    %p84 = scmp.ne.s32.totalorder %s75, %s76
    %p85 = scmp.eq.s32.totalorder %s23, 0
    %p86 = por %p84, %p85
    %p87 = scmp.ne.s32.totalorder %s75, %s76
    %p88 = scmp.eq.s32.totalorder %s24, 1
    %p89 = por %p87, %p88
    %p91 = scmp.ne.s32.totalorder %s76, %s90
    %p92 = scmp.eq.s32.totalorder %s24, 0
    %p93 = por %p91, %p92
    %s95 = sadd.s32 %s94, 1
    %p98 = scmp.eq.s32.totalorder %s18, 1
    %p99 = scmp.ne.s32.totalorder %s94, %s96
    %p100 = scmp.eq.s32.totalorder %s18, 0
    %p101 = por %p99, %p100
    %p102 = scmp.ne.s32.totalorder %s94, %s96
    %p103 = scmp.eq.s32.totalorder %s23, 1
    %p104 = por %p102, %p103
    %p105 = scmp.ne.s32.totalorder %s96, %s97
    %p106 = scmp.eq.s32.totalorder %s23, 0
    %p107 = por %p105, %p106
    %p108 = scmp.ne.s32.totalorder %s96, %s97
    %p109 = scmp.eq.s32.totalorder %s24, 1
    %p110 = por %p108, %p109
    %p112 = scmp.ne.s32.totalorder %s97, %s111
    %p113 = scmp.eq.s32.totalorder %s24, 0
    %p114 = por %p112, %p113
    %s116 = sadd.s32 %s115, 1
    %p119 = scmp.eq.s32.totalorder %s18, 1
    %p120 = scmp.ne.s32.totalorder %s115, %s117
    %p121 = scmp.eq.s32.totalorder %s18, 0
    %p122 = por %p120, %p121
    %p123 = scmp.ne.s32.totalorder %s115, %s117
    %p124 = scmp.eq.s32.totalorder %s23, 1
    %p125 = por %p123, %p124
    %p126 = scmp.ne.s32.totalorder %s117, %s118
    %p127 = scmp.eq.s32.totalorder %s23, 0
    %p128 = por %p126, %p127
    %p129 = scmp.ne.s32.totalorder %s117, %s118
    %p130 = scmp.eq.s32.totalorder %s24, 1
    %p131 = por %p129, %p130
    %p133 = scmp.ne.s32.totalorder %s118, %s132
    %p134 = scmp.eq.s32.totalorder %s24, 0
    %p135 = por %p133, %p134
    %s137 = sadd.s32 %s136, 1
    %p140 = scmp.eq.s32.totalorder %s18, 1
    %p141 = scmp.ne.s32.totalorder %s136, %s138
    %p142 = scmp.eq.s32.totalorder %s18, 0
    %p143 = por %p141, %p142
    %p144 = scmp.ne.s32.totalorder %s136, %s138
    %p145 = scmp.eq.s32.totalorder %s23, 1
    %p146 = por %p144, %p145
    %p147 = scmp.ne.s32.totalorder %s138, %s139
    %p148 = scmp.eq.s32.totalorder %s23, 0
    %p149 = por %p147, %p148
    %p150 = scmp.ne.s32.totalorder %s138, %s139
    %p151 = scmp.eq.s32.totalorder %s24, 1
    %p152 = por %p150, %p151
    %p154 = scmp.ne.s32.totalorder %s139, %s153
    %p155 = scmp.eq.s32.totalorder %s24, 0
    %p156 = por %p154, %p155
    %s158 = sadd.s32 %s157, 1
    %p161 = scmp.eq.s32.totalorder %s18, 1
    %p162 = scmp.ne.s32.totalorder %s157, %s159
    %p163 = scmp.eq.s32.totalorder %s18, 0
    %p164 = por %p162, %p163
    %p165 = scmp.ne.s32.totalorder %s157, %s159
    %p166 = scmp.eq.s32.totalorder %s23, 1
    %p167 = por %p165, %p166
    %p168 = scmp.ne.s32.totalorder %s159, %s160
    %p169 = scmp.eq.s32.totalorder %s23, 0
    %p170 = por %p168, %p169
    %p171 = scmp.ne.s32.totalorder %s159, %s160
    %p172 = scmp.eq.s32.totalorder %s24, 1
    %p173 = por %p171, %p172
    %p175 = scmp.ne.s32.totalorder %s160, %s174
    %p176 = scmp.eq.s32.totalorder %s24, 0
    %p177 = por %p175, %p176
    %s179 = sadd.s32 %s178, 1
    %p182 = scmp.eq.s32.totalorder %s18, 1
    %p183 = scmp.ne.s32.totalorder %s178, %s180
    %p184 = scmp.eq.s32.totalorder %s18, 0
    %p185 = por %p183, %p184
    %p186 = scmp.ne.s32.totalorder %s178, %s180
    %p187 = scmp.eq.s32.totalorder %s23, 1
    %p188 = por %p186, %p187
    %p189 = scmp.ne.s32.totalorder %s180, %s181
    %p190 = scmp.eq.s32.totalorder %s23, 0
    %p191 = por %p189, %p190
    %p192 = scmp.ne.s32.totalorder %s180, %s181
    %p193 = scmp.eq.s32.totalorder %s24, 1
    %p194 = por %p192, %p193
    %p196 = scmp.ne.s32.totalorder %s181, %s195
    %p197 = scmp.eq.s32.totalorder %s24, 0
    %p198 = por %p196, %p197
    %s200 = sadd.s32 %s199, 1
    %p203 = scmp.eq.s32.totalorder %s18, 1
    %p204 = scmp.ne.s32.totalorder %s199, %s201
    %p205 = scmp.eq.s32.totalorder %s18, 0
    %p206 = por %p204, %p205
    %p207 = scmp.ne.s32.totalorder %s199, %s201
    %p208 = scmp.eq.s32.totalorder %s23, 1
    %p209 = por %p207, %p208
    %p210 = scmp.ne.s32.totalorder %s201, %s202
    %p211 = scmp.eq.s32.totalorder %s23, 0
    %p212 = por %p210, %p211
    %p213 = scmp.ne.s32.totalorder %s201, %s202
    %p214 = scmp.eq.s32.totalorder %s24, 1
    %p215 = por %p213, %p214
    %p217 = scmp.ne.s32.totalorder %s202, %s216
    %p218 = scmp.eq.s32.totalorder %s24, 0
    %p219 = por %p217, %p218
    %s221 = sadd.s32 %s220, 1
    %p224 = scmp.eq.s32.totalorder %s18, 1
    %p225 = scmp.ne.s32.totalorder %s220, %s222
    %p226 = scmp.eq.s32.totalorder %s18, 0
    %p227 = por %p225, %p226
    %p228 = scmp.ne.s32.totalorder %s220, %s222
    %p229 = scmp.eq.s32.totalorder %s23, 1
    %p230 = por %p228, %p229
    %p231 = scmp.ne.s32.totalorder %s222, %s223
    %p232 = scmp.eq.s32.totalorder %s23, 0
    %p233 = por %p231, %p232
    %p234 = scmp.ne.s32.totalorder %s222, %s223
    %p235 = scmp.eq.s32.totalorder %s24, 1
    %p236 = por %p234, %p235
    %p238 = scmp.ne.s32.totalorder %s223, %s237
    %p239 = scmp.eq.s32.totalorder %s24, 0
    %p240 = por %p238, %p239
    %s241 = ssub.s32 %s18, %s25
    %p242 = scmp.eq.s32.totalorder %s241, 0
    %s244 = sadd.s32 %s243, 1
    %s245 = scalar_select %p242, %s243, %s244
    %p248 = pneg %p242
    %p249 = scmp.eq.s32.totalorder %s18, 1
    %p250 = por %p248, %p249
    %p251 = scmp.ne.s32.totalorder %s243, %s246
    %p252 = scmp.eq.s32.totalorder %s18, 0
    %p253 = por %p251, %p252
    %p254 = scmp.ne.s32.totalorder %s243, %s246
    %p255 = scmp.eq.s32.totalorder %s23, 1
    %p256 = por %p254, %p255
    %p257 = scmp.ne.s32.totalorder %s246, %s247
    %p258 = scmp.eq.s32.totalorder %s23, 0
    %p259 = por %p257, %p258
    %p260 = scmp.ne.s32.totalorder %s246, %s247
    %p261 = scmp.eq.s32.totalorder %s24, 1
    %p262 = por %p260, %p261
    %p264 = scmp.ne.s32.totalorder %s247, %s263
    %p265 = scmp.eq.s32.totalorder %s24, 0
    %p266 = por %p264, %p265
    %p267 = scmp.le.s32.totalorder 1, %s18
    %p268 = scmp.lt.s32.totalorder %s18, 3
    %p269 = pnand %p267, %p268
    %p270 = pneg %p269
    // Predicated region
    $region9: #{_pinn_forward_jit.1} parent=5 // pred_check
      _
    $region10: #{_pinn_forward_jit.1} parent=5 // pred_check_branch
      %272 = sbr.rel (%p269) target = $region12
    $region11: #{_pinn_forward_jit.1} parent=5 // pred_region
      %s273 = ssub.s32 %s18, 1
      // Predicated region
      $region13: #{_pinn_forward_jit.1} parent=11 // pred_check
        %p274 = pneg %p65
      $region14: #{_pinn_forward_jit.1} parent=11 // pred_check_branch
        %276 = sbr.rel (%p274) target = $region16
      $region15: #{_pinn_forward_jit.1} parent=11 // pred_region
        _
      $region16: #{_pinn_forward_jit.1} parent=11 // pred_fallthru
        _
      // Predicated region
      $region17: #{_pinn_forward_jit.1} parent=11 // pred_check
        %p277 = pneg %p86
      $region18: #{_pinn_forward_jit.1} parent=11 // pred_check_branch
        %279 = sbr.rel (%p277) target = $region20
      $region19: #{_pinn_forward_jit.1} parent=11 // pred_region
        _
      $region20: #{_pinn_forward_jit.1} parent=11 // pred_fallthru
        _
      // Predicated region
      $region21: #{_pinn_forward_jit.1} parent=11 // pred_check
        %p280 = pneg %p107
      $region22: #{_pinn_forward_jit.1} parent=11 // pred_check_branch
        %282 = sbr.rel (%p280) target = $region24
      $region23: #{_pinn_forward_jit.1} parent=11 // pred_region
        _
      $region24: #{_pinn_forward_jit.1} parent=11 // pred_fallthru
        _
      // Predicated region
      $region25: #{_pinn_forward_jit.1} parent=11 // pred_check
        %p283 = pneg %p128
      $region26: #{_pinn_forward_jit.1} parent=11 // pred_check_branch
        %285 = sbr.rel (%p283) target = $region28
      $region27: #{_pinn_forward_jit.1} parent=11 // pred_region
        _
      $region28: #{_pinn_forward_jit.1} parent=11 // pred_fallthru
        _
      // Predicated region
      $region29: #{_pinn_forward_jit.1} parent=11 // pred_check
        %p286 = pneg %p149
      $region30: #{_pinn_forward_jit.1} parent=11 // pred_check_branch
        %288 = sbr.rel (%p286) target = $region32
      $region31: #{_pinn_forward_jit.1} parent=11 // pred_region
        _
      $region32: #{_pinn_forward_jit.1} parent=11 // pred_fallthru
        _
      // Predicated region
      $region33: #{_pinn_forward_jit.1} parent=11 // pred_check
        %p289 = pneg %p170
      $region34: #{_pinn_forward_jit.1} parent=11 // pred_check_branch
        %291 = sbr.rel (%p289) target = $region36
      $region35: #{_pinn_forward_jit.1} parent=11 // pred_region
        _
      $region36: #{_pinn_forward_jit.1} parent=11 // pred_fallthru
        _
      // Predicated region
      $region37: #{_pinn_forward_jit.1} parent=11 // pred_check
        %p292 = pneg %p191
      $region38: #{_pinn_forward_jit.1} parent=11 // pred_check_branch
        %294 = sbr.rel (%p292) target = $region40
      $region39: #{_pinn_forward_jit.1} parent=11 // pred_region
        _
      $region40: #{_pinn_forward_jit.1} parent=11 // pred_fallthru
        _
      // Predicated region
      $region41: #{_pinn_forward_jit.1} parent=11 // pred_check
        %p295 = pneg %p212
      $region42: #{_pinn_forward_jit.1} parent=11 // pred_check_branch
        %297 = sbr.rel (%p295) target = $region44
      $region43: #{_pinn_forward_jit.1} parent=11 // pred_region
        _
      $region44: #{_pinn_forward_jit.1} parent=11 // pred_fallthru
        _
      // Predicated region
      $region45: #{_pinn_forward_jit.1} parent=11 // pred_check
        %p298 = pneg %p233
      $region46: #{_pinn_forward_jit.1} parent=11 // pred_check_branch
        %300 = sbr.rel (%p298) target = $region48
      $region47: #{_pinn_forward_jit.1} parent=11 // pred_region
        _
      $region48: #{_pinn_forward_jit.1} parent=11 // pred_fallthru
        _
    $region12: #{_pinn_forward_jit.1} parent=5 // pred_fallthru
      _
    %p301 = scmp.lt.s32.totalorder %s18, 2
    // Predicated region
    $region49: #{_pinn_forward_jit.1} parent=5 // pred_check
      %p302 = pneg %p301
    $region50: #{_pinn_forward_jit.1} parent=5 // pred_check_branch
      %304 = sbr.rel (%p302) target = $region52
    $region51: #{_pinn_forward_jit.1} parent=5 // pred_region
      // Predicated region
      $region53: #{_pinn_forward_jit.1} parent=51 // pred_check
        %p305 = pneg %p38
      $region54: #{_pinn_forward_jit.1} parent=51 // pred_check_branch
        %307 = sbr.rel (%p305) target = $region56
      $region55: #{_pinn_forward_jit.1} parent=51 // pred_region
        %p308 = scmp.lt.s32.totalorder %s18, 1
        %s309 = scalar_select %p308, %s18, 1
        %s310 = smul.addr %s309, 2
        %s311 = scalar_lea.vmem %s0, %s310
      $region56: #{_pinn_forward_jit.1} parent=51 // pred_fallthru
        _
    $region52: #{_pinn_forward_jit.1} parent=5 // pred_fallthru
      _
    %p312 = scmp.le.s32.totalorder 1, %s18
    %p313 = scmp.lt.s32.totalorder %s18, 3
    %p314 = pnand %p312, %p313
    %p315 = pneg %p314
    // Predicated region
    $region57: #{_pinn_forward_jit.1} parent=5 // pred_check
      _
    $region58: #{_pinn_forward_jit.1} parent=5 // pred_check_branch
      %317 = sbr.rel (%p314) target = $region60
    $region59: #{_pinn_forward_jit.1} parent=5 // pred_region
      %s318 = ssub.s32 %s18, 1
      %p319 = scmp.lt.s32.totalorder %s23, 1
      %s320 = scalar_select %p319, %s23, 1
      %s321 = smul.addr %s320, 2
      %s322 = scalar_lea.vmem %s0, %s321
      %p323 = pneg %p44
      %p324 = pneg %p41
      %p325 = pneg %p65
      %p326 = pneg %p62
      %p327 = pneg %p86
      %p328 = pneg %p83
      %p329 = pneg %p107
      %p330 = pneg %p104
      %p331 = pneg %p128
      %p332 = pneg %p125
      %p333 = pneg %p149
      %p334 = pneg %p146
      %p335 = pneg %p170
      %p336 = pneg %p167
      %p337 = pneg %p191
      %p338 = pneg %p188
      %p339 = pneg %p212
      %p340 = pneg %p209
      %p341 = pneg %p233
      %p342 = pneg %p230
      %p343 = pneg %p259
      %p344 = pneg %p256
      %p345 = scmp.lt.s32.totalorder %s23, 1
      %s346 = scalar_select %p345, %s23, 1
      %s347 = scalar_lea.vmem %s10, %s346
      %p348 = scmp.lt.s32.totalorder %s23, 1
      %s349 = scalar_select %p348, %s23, 1
      %s350 = smul.addr %s349, 2
      %s351 = scalar_lea.vmem %s0, %s350
      %p352 = scmp.lt.s32.totalorder %s23, 1
      %s353 = scalar_select %p352, %s23, 1
      %s354 = scalar_lea.vmem %s10, %s353
      %v355 = vld [vmem:[%s3] sm:$0xff]
      %v356 = vld [vmem:[%s3 + $0x8] sm:$0xff]
      %v357 = vld [vmem:[%s3 + $0x10] sm:$0xff]
      %v358 = vld [vmem:[%s3 + $0x18] sm:$0xff]
      %v359 = vld [vmem:[%s1] sm:$0xff]
      %v360 = vld [vmem:[%s1 + $0x8] sm:$0xff]
      %v361 = vld [vmem:[%s1 + $0x10] sm:$0xff]
      %v362 = vld [vmem:[%s1 + $0x18] sm:$0xff]
      %v363 = vld [vmem:[%s351] sm:$0x1]
      %365 = vset.pattern.permute.xlu0 0
      %366 = vperm.xlu0 %365, %v359
      %v367 = vpop.permute.xlu0 %366
      %370 = vset.pattern.permute.xlu0 0
      %371 = vperm.xlu0 %370, %v360
      %v372 = vpop.permute.xlu0 %371
      %375 = vset.pattern.permute.xlu0 0
      %376 = vperm.xlu0 %375, %v361
      %v377 = vpop.permute.xlu0 %376
      %380 = vset.pattern.permute.xlu0 0
      %381 = vperm.xlu0 %380, %v362
      %v382 = vpop.permute.xlu0 %381
      %v384 = vlaneseq
      %v385 = vshrl.u32 %v384, 7
      %v386 = vsub.s32 0, %v385
      %v387 = vrot.slane %v363, %v386
      %v388 = vmul.f32 %v367, %v387
      %v389 = vmul.f32 %v372, %v387
      %v390 = vmul.f32 %v377, %v387
      %v391 = vmul.f32 %v382, %v387
      %393 = vset.pattern.permute.xlu0 0
      %394 = vperm.xlu0 %393, %v355
      %v395 = vpop.permute.xlu0 %394
      %398 = vset.pattern.permute.xlu0 0
      %399 = vperm.xlu0 %398, %v356
      %v400 = vpop.permute.xlu0 %399
      %403 = vset.pattern.permute.xlu0 0
      %404 = vperm.xlu0 %403, %v357
      %v405 = vpop.permute.xlu0 %404
      %408 = vset.pattern.permute.xlu0 0
      %409 = vperm.xlu0 %408, %v358
      %v410 = vpop.permute.xlu0 %409
      %v412 = vadd.f32 %v395, %v388
      %v413 = vadd.f32 %v400, %v389
      %v414 = vadd.f32 %v405, %v390
      %v415 = vadd.f32 %v410, %v391
      %v416 = vld [vmem:[%s2] sm:$0xff]
      %v417 = vld [vmem:[%s2 + $0x8] sm:$0xff]
      %v418 = vld [vmem:[%s2 + $0x10] sm:$0xff]
      %v419 = vld [vmem:[%s2 + $0x18] sm:$0xff]
      %v420 = vld [vmem:[%s351 + $0x1] sm:$0x1]
      %422 = vset.pattern.permute.xlu0 0
      %423 = vperm.xlu0 %422, %v416
      %v424 = vpop.permute.xlu0 %423
      %427 = vset.pattern.permute.xlu0 0
      %428 = vperm.xlu0 %427, %v417
      %v429 = vpop.permute.xlu0 %428
      %432 = vset.pattern.permute.xlu0 0
      %433 = vperm.xlu0 %432, %v418
      %v434 = vpop.permute.xlu0 %433
      %437 = vset.pattern.permute.xlu0 0
      %438 = vperm.xlu0 %437, %v419
      %v439 = vpop.permute.xlu0 %438
      %v441 = vlaneseq
      %v442 = vshrl.u32 %v441, 7
      %v443 = vsub.s32 0, %v442
      %v444 = vrot.slane %v420, %v443
      %v445 = vmul.f32 %v424, %v444
      %v446 = vmul.f32 %v429, %v444
      %v447 = vmul.f32 %v434, %v444
      %v448 = vmul.f32 %v439, %v444
      %v449 = vadd.f32 %v412, %v445
      %v450 = vadd.f32 %v413, %v446
      %v451 = vadd.f32 %v414, %v447
      %v452 = vadd.f32 %v415, %v448
      %v453 = vtanh.pop %v449
      %v454 = vtanh.pop %v450
      %v455 = vtanh.pop %v451
      %v456 = vtanh.pop %v452
      %v457 = vld [vmem:[%s4] sm:$0xff]
      %v458 = vld [vmem:[%s4 + $0x8] sm:$0xff]
      %v459 = vld [vmem:[%s4 + $0x10] sm:$0xff]
      %v460 = vld [vmem:[%s4 + $0x18] sm:$0xff]
      %v461 = vld [vmem:[%s5] sm:$0xff]
      %v462 = vld [vmem:[%s5 + $0x8] sm:$0xff]
      %v463 = vld [vmem:[%s5 + $0x10] sm:$0xff]
      %v464 = vld [vmem:[%s5 + $0x18] sm:$0xff]
      %466 = vset.pattern.permute.xlu0 0
      %467 = vperm.xlu0 %466, %v461
      %v468 = vpop.permute.xlu0 %467
      %471 = vset.pattern.permute.xlu0 0
      %472 = vperm.xlu0 %471, %v462
      %v473 = vpop.permute.xlu0 %472
      %476 = vset.pattern.permute.xlu0 0
      %477 = vperm.xlu0 %476, %v463
      %v478 = vpop.permute.xlu0 %477
      %481 = vset.pattern.permute.xlu0 0
      %482 = vperm.xlu0 %481, %v464
      %v483 = vpop.permute.xlu0 %482
      %vm485 = vcmask 261120
      %v487 = vsel %vm485, %v457, 0
      %v490 = vsel %vm485, %v458, 0
      %v493 = vsel %vm485, %v459, 0
      %v496 = vsel %vm485, %v460, 0
      %498 = vmatprep.subr.mxu0 0.0
      %v499 = vand.u32 %v453, 4294901760
      %500 = vmatpush1.msra.mxu0 %v499
      %501 = vmatprep.subr.mxu0 0.0
      %v502 = vand.u32 %v454, 4294901760
      %503 = vmatpush1.msra.mxu0 %v502
      %504 = vmatprep.subr.mxu0 0.0
      %v505 = vand.u32 %v455, 4294901760
      %506 = vmatpush1.msra.mxu0 %v505
      %507 = vmatprep.subr.mxu0 0.0
      %v508 = vand.u32 %v456, 4294901760
      %509 = vmatpush1.msra.mxu0 %v508
      %510 = vmatprep.subr.mxu0 0.0
      %511 = vmatpush1.msra.mxu0 0.0
      %512 = vmatprep.subr.mxu0 0.0
      %513 = vmatpush1.msra.mxu0 0.0
      %514 = vmatprep.subr.mxu0 0.0
      %515 = vmatpush1.msra.mxu0 0.0
      %516 = vmatprep.subr.mxu0 0.0
      %517 = vmatpush1.msra.mxu0 0.0
      %518 = vmatprep.subr.mxu0 0.0
      %519 = vmatpush1.msra.mxu0 0.0
      %520 = vmatprep.subr.mxu0 0.0
      %521 = vmatpush1.msra.mxu0 0.0
      %522 = vmatprep.subr.mxu0 0.0
      %523 = vmatpush1.msra.mxu0 0.0
      %524 = vmatprep.subr.mxu0 0.0
      %525 = vmatpush1.msra.mxu0 0.0
      %526 = vmatprep.subr.mxu0 0.0
      %527 = vmatpush1.msra.mxu0 0.0
      %528 = vmatprep.subr.mxu0 0.0
      %529 = vmatpush1.msra.mxu0 0.0
      %530 = vmatprep.subr.mxu0 0.0
      %531 = vmatpush1.msra.mxu0 0.0
      %532 = vmatprep.subr.mxu0 0.0
      %533 = vmatpush1.msra.mxu0 0.0
      %534 = vmatprep.subr.mxu0 0.0
      %535 = vmatpush1.msra.mxu0 0.0
      %536 = vmatprep.subr.mxu0 0.0
      %537 = vmatpush1.msra.mxu0 0.0
      %538 = vmatprep.subr.mxu0 0.0
      %539 = vmatpush1.msra.mxu0 0.0
      %540 = vmatprep.subr.mxu0 0.0
      %541 = vmatpush1.msra.mxu0 0.0
      %542 = vmatprep.subr.mxu0 0.0
      %543 = vmatpush1.msra.mxu0 0.0
      %544 = vmatprep.subr.mxu0 0.0
      %545 = vmatpush1.msra.mxu0 0.0
      %546 = vmatprep.subr.mxu0 0.0
      %547 = vmatpush1.msra.mxu0 0.0
      %548 = vmatprep.subr.mxu0 0.0
      %549 = vmatpush1.msra.mxu0 0.0
      %550 = vmatprep.subr.mxu0 0.0
      %551 = vmatpush1.msra.mxu0 0.0
      %552 = vmatprep.subr.mxu0 0.0
      %553 = vmatpush1.msra.mxu0 0.0
      %554 = vmatprep.subr.mxu0 0.0
      %555 = vmatpush1.msra.mxu0 0.0
      %556 = vmatprep.subr.mxu0 0.0
      %557 = vmatpush1.msra.mxu0 0.0
      %558 = vmatprep.subr.mxu0 0.0
      %559 = vmatpush1.msra.mxu0 0.0
      %560 = vmatprep.subr.mxu0 0.0
      %561 = vmatpush1.msra.mxu0 0.0
      %562 = vmatprep.subr.mxu0 0.0
      %563 = vmatpush1.msra.mxu0 0.0
      %564 = vmatprep.subr.mxu0 0.0
      %565 = vmatpush1.msra.mxu0 0.0
      %566 = vmatprep.mubr.f32.mxu0 0.0
      %v567 = vand.u32 %v487, 4294901760
      %v568 = vsub.f32 %v487, %v567
      %v569 = vand.u32 %v568, 4294901760
      %v570 = vsub.f32 %v568, %v569
      %v571 = vand.u32 %v570, 4294901760
      %572 = vmatmul.mubr.f32.gmra.mrb[0].mxu0 %v571
      %v573 = vpop.f32.mrb[0].mxu0
      %v574 = vadd.f32 %v468, %v573
      %v575 = vpop.f32.mrb[0].mxu0
      %576 = vmatprep.mubr.f32.mxu0 0.0
      %v577 = vand.u32 %v490, 4294901760
      %v578 = vsub.f32 %v490, %v577
      %v579 = vand.u32 %v578, 4294901760
      %v580 = vsub.f32 %v578, %v579
      %v581 = vand.u32 %v580, 4294901760
      %582 = vmatmul.mubr.f32.gmra.mrb[0].mxu0 %v581
      %v583 = vpop.f32.mrb[0].mxu0
      %v584 = vadd.f32 %v473, %v583
      %v585 = vpop.f32.mrb[0].mxu0
      %586 = vmatprep.mubr.f32.mxu0 0.0
      %v587 = vand.u32 %v493, 4294901760
      %v588 = vsub.f32 %v493, %v587
      %v589 = vand.u32 %v588, 4294901760
      %v590 = vsub.f32 %v588, %v589
      %v591 = vand.u32 %v590, 4294901760
      %592 = vmatmul.mubr.f32.gmra.mrb[0].mxu0 %v591
      %v593 = vpop.f32.mrb[0].mxu0
      %v594 = vadd.f32 %v478, %v593
      %v595 = vpop.f32.mrb[0].mxu0
      %596 = vmatprep.mubr.f32.mxu0 0.0
      %v597 = vand.u32 %v496, 4294901760
      %v598 = vsub.f32 %v496, %v597
      %v599 = vand.u32 %v598, 4294901760
      %v600 = vsub.f32 %v598, %v599
      %v601 = vand.u32 %v600, 4294901760
      %602 = vmatmul.mubr.f32.gmra.mrb[0].mxu0 %v601
      %v603 = vpop.f32.mrb[0].mxu0
      %v604 = vadd.f32 %v483, %v603
      %v605 = vpop.f32.mrb[0].mxu0
      %606 = vdwg.mxu0
      %607 = vmatprep.subr.mxu0 0.0
      %v608 = vand.u32 %v453, 4294901760
      %v609 = vsub.f32 %v453, %v608
      %v610 = vand.u32 %v609, 4294901760
      %v611 = vsub.f32 %v609, %v610
      %v612 = vand.u32 %v611, 4294901760
      %613 = vmatpush1.msra.mxu0 %v612
      %614 = vmatprep.subr.mxu0 0.0
      %v615 = vand.u32 %v454, 4294901760
      %v616 = vsub.f32 %v454, %v615
      %v617 = vand.u32 %v616, 4294901760
      %v618 = vsub.f32 %v616, %v617
      %v619 = vand.u32 %v618, 4294901760
      %620 = vmatpush1.msra.mxu0 %v619
      %621 = vmatprep.subr.mxu0 0.0
      %v622 = vand.u32 %v455, 4294901760
      %v623 = vsub.f32 %v455, %v622
      %v624 = vand.u32 %v623, 4294901760
      %v625 = vsub.f32 %v623, %v624
      %v626 = vand.u32 %v625, 4294901760
      %627 = vmatpush1.msra.mxu0 %v626
      %628 = vmatprep.subr.mxu0 0.0
      %v629 = vand.u32 %v456, 4294901760
      %v630 = vsub.f32 %v456, %v629
      %v631 = vand.u32 %v630, 4294901760
      %v632 = vsub.f32 %v630, %v631
      %v633 = vand.u32 %v632, 4294901760
      %634 = vmatpush1.msra.mxu0 %v633
      %635 = vmatprep.subr.mxu0 0.0
      %636 = vmatpush1.msra.mxu0 0.0
      %637 = vmatprep.subr.mxu0 0.0
      %638 = vmatpush1.msra.mxu0 0.0
      %639 = vmatprep.subr.mxu0 0.0
      %640 = vmatpush1.msra.mxu0 0.0
      %641 = vmatprep.subr.mxu0 0.0
      %642 = vmatpush1.msra.mxu0 0.0
      %643 = vmatprep.subr.mxu0 0.0
      %644 = vmatpush1.msra.mxu0 0.0
      %645 = vmatprep.subr.mxu0 0.0
      %646 = vmatpush1.msra.mxu0 0.0
      %647 = vmatprep.subr.mxu0 0.0
      %648 = vmatpush1.msra.mxu0 0.0
      %649 = vmatprep.subr.mxu0 0.0
      %650 = vmatpush1.msra.mxu0 0.0
      %651 = vmatprep.subr.mxu0 0.0
      %652 = vmatpush1.msra.mxu0 0.0
      %653 = vmatprep.subr.mxu0 0.0
      %654 = vmatpush1.msra.mxu0 0.0
      %655 = vmatprep.subr.mxu0 0.0
      %656 = vmatpush1.msra.mxu0 0.0
      %657 = vmatprep.subr.mxu0 0.0
      %658 = vmatpush1.msra.mxu0 0.0
      %659 = vmatprep.subr.mxu0 0.0
      %660 = vmatpush1.msra.mxu0 0.0
      %661 = vmatprep.subr.mxu0 0.0
      %662 = vmatpush1.msra.mxu0 0.0
      %663 = vmatprep.subr.mxu0 0.0
      %664 = vmatpush1.msra.mxu0 0.0
      %665 = vmatprep.subr.mxu0 0.0
      %666 = vmatpush1.msra.mxu0 0.0
      %667 = vmatprep.subr.mxu0 0.0
      %668 = vmatpush1.msra.mxu0 0.0
      %669 = vmatprep.subr.mxu0 0.0
      %670 = vmatpush1.msra.mxu0 0.0
      %671 = vmatprep.subr.mxu0 0.0
      %672 = vmatpush1.msra.mxu0 0.0
      %673 = vmatprep.subr.mxu0 0.0
      %674 = vmatpush1.msra.mxu0 0.0
      %675 = vmatprep.subr.mxu0 0.0
      %676 = vmatpush1.msra.mxu0 0.0
      %677 = vmatprep.subr.mxu0 0.0
      %678 = vmatpush1.msra.mxu0 0.0
      %679 = vmatprep.subr.mxu0 0.0
      %680 = vmatpush1.msra.mxu0 0.0
      %681 = vmatprep.subr.mxu0 0.0
      %682 = vmatpush1.msra.mxu0 0.0
      %683 = vmatprep.subr.mxu0 0.0
      %684 = vmatpush1.msra.mxu0 0.0
      %685 = vmatprep.subr.mxu0 0.0
      %686 = vmatpush1.msra.mxu0 0.0
      %687 = vmatprep.subr.mxu0 0.0
      %688 = vmatpush1.msra.mxu0 0.0
      %689 = vmatprep.subr.mxu0 0.0
      %690 = vmatpush1.msra.mxu0 0.0
      %691 = vmatprep.mubr.f32.mxu0 0.0
      %v692 = vand.u32 %v487, 4294901760
      %693 = vmatmul.mubr.f32.gmra.mrb[0].mxu0 %v692
      %v694 = vpop.f32.mrb[0].mxu0
      %v695 = vadd.f32 %v574, %v694
      %v696 = vpop.f32.mrb[0].mxu0
      %697 = vmatprep.mubr.f32.mxu0 0.0
      %v698 = vand.u32 %v490, 4294901760
      %699 = vmatmul.mubr.f32.gmra.mrb[0].mxu0 %v698
      %v700 = vpop.f32.mrb[0].mxu0
      %v701 = vadd.f32 %v584, %v700
      %v702 = vpop.f32.mrb[0].mxu0
      %703 = vmatprep.mubr.f32.mxu0 0.0
      %v704 = vand.u32 %v493, 4294901760
      %705 = vmatmul.mubr.f32.gmra.mrb[0].mxu0 %v704
      %v706 = vpop.f32.mrb[0].mxu0
      %v707 = vadd.f32 %v594, %v706
      %v708 = vpop.f32.mrb[0].mxu0
      %709 = vmatprep.mubr.f32.mxu0 0.0
      %v710 = vand.u32 %v496, 4294901760
      %711 = vmatmul.mubr.f32.gmra.mrb[0].mxu0 %v710
      %v712 = vpop.f32.mrb[0].mxu0
      %v713 = vadd.f32 %v604, %v712
      %v714 = vpop.f32.mrb[0].mxu0
      %715 = vdwg.mxu0
      %716 = vmatprep.subr.mxu0 0.0
      %v717 = vand.u32 %v453, 4294901760
      %v718 = vsub.f32 %v453, %v717
      %719 = vmatpush1.msra.mxu0 %v718
      %720 = vmatprep.subr.mxu0 0.0
      %v721 = vand.u32 %v454, 4294901760
      %v722 = vsub.f32 %v454, %v721
      %723 = vmatpush1.msra.mxu0 %v722
      %724 = vmatprep.subr.mxu0 0.0
      %v725 = vand.u32 %v455, 4294901760
      %v726 = vsub.f32 %v455, %v725
      %727 = vmatpush1.msra.mxu0 %v726
      %728 = vmatprep.subr.mxu0 0.0
      %v729 = vand.u32 %v456, 4294901760
      %v730 = vsub.f32 %v456, %v729
      %731 = vmatpush1.msra.mxu0 %v730
      %732 = vmatprep.subr.mxu0 0.0
      %733 = vmatpush1.msra.mxu0 0.0
      %734 = vmatprep.subr.mxu0 0.0
      %735 = vmatpush1.msra.mxu0 0.0
      %736 = vmatprep.subr.mxu0 0.0
      %737 = vmatpush1.msra.mxu0 0.0
      %738 = vmatprep.subr.mxu0 0.0
      %739 = vmatpush1.msra.mxu0 0.0
      %740 = vmatprep.subr.mxu0 0.0
      %741 = vmatpush1.msra.mxu0 0.0
      %742 = vmatprep.subr.mxu0 0.0
      %743 = vmatpush1.msra.mxu0 0.0
      %744 = vmatprep.subr.mxu0 0.0
      %745 = vmatpush1.msra.mxu0 0.0
      %746 = vmatprep.subr.mxu0 0.0
      %747 = vmatpush1.msra.mxu0 0.0
      %748 = vmatprep.subr.mxu0 0.0
      %749 = vmatpush1.msra.mxu0 0.0
      %750 = vmatprep.subr.mxu0 0.0
      %751 = vmatpush1.msra.mxu0 0.0
      %752 = vmatprep.subr.mxu0 0.0
      %753 = vmatpush1.msra.mxu0 0.0
      %754 = vmatprep.subr.mxu0 0.0
      %755 = vmatpush1.msra.mxu0 0.0
      %756 = vmatprep.subr.mxu0 0.0
      %757 = vmatpush1.msra.mxu0 0.0
      %758 = vmatprep.subr.mxu0 0.0
      %759 = vmatpush1.msra.mxu0 0.0
      %760 = vmatprep.subr.mxu0 0.0
      %761 = vmatpush1.msra.mxu0 0.0
      %762 = vmatprep.subr.mxu0 0.0
      %763 = vmatpush1.msra.mxu0 0.0
      %764 = vmatprep.subr.mxu0 0.0
      %765 = vmatpush1.msra.mxu0 0.0
      %766 = vmatprep.subr.mxu0 0.0
      %767 = vmatpush1.msra.mxu0 0.0
      %768 = vmatprep.subr.mxu0 0.0
      %769 = vmatpush1.msra.mxu0 0.0
      %770 = vmatprep.subr.mxu0 0.0
      %771 = vmatpush1.msra.mxu0 0.0
      %772 = vmatprep.subr.mxu0 0.0
      %773 = vmatpush1.msra.mxu0 0.0
      %774 = vmatprep.subr.mxu0 0.0
      %775 = vmatpush1.msra.mxu0 0.0
      %776 = vmatprep.subr.mxu0 0.0
      %777 = vmatpush1.msra.mxu0 0.0
      %778 = vmatprep.subr.mxu0 0.0
      %779 = vmatpush1.msra.mxu0 0.0
      %780 = vmatprep.subr.mxu0 0.0
      %781 = vmatpush1.msra.mxu0 0.0
      %782 = vmatprep.subr.mxu0 0.0
      %783 = vmatpush1.msra.mxu0 0.0
      %784 = vmatprep.subr.mxu0 0.0
      %785 = vmatpush1.msra.mxu0 0.0
      %786 = vmatprep.subr.mxu0 0.0
      %787 = vmatpush1.msra.mxu0 0.0
      %788 = vmatprep.mubr.f32.mxu0 0.0
      %v789 = vand.u32 %v487, 4294901760
      %v790 = vsub.f32 %v487, %v789
      %791 = vmatmul.mubr.f32.gmra.mrb[0].mxu0 %v790
      %v792 = vpop.f32.mrb[0].mxu0
      %v793 = vadd.f32 %v695, %v792
      %v794 = vpop.f32.mrb[0].mxu0
      %795 = vmatprep.mubr.f32.mxu0 0.0
      %v796 = vand.u32 %v490, 4294901760
      %v797 = vsub.f32 %v490, %v796
      %798 = vmatmul.mubr.f32.gmra.mrb[0].mxu0 %v797
      %v799 = vpop.f32.mrb[0].mxu0
      %v800 = vadd.f32 %v701, %v799
      %v801 = vpop.f32.mrb[0].mxu0
      %802 = vmatprep.mubr.f32.mxu0 0.0
      %v803 = vand.u32 %v493, 4294901760
      %v804 = vsub.f32 %v493, %v803
      %805 = vmatmul.mubr.f32.gmra.mrb[0].mxu0 %v804
      %v806 = vpop.f32.mrb[0].mxu0
      %v807 = vadd.f32 %v707, %v806
      %v808 = vpop.f32.mrb[0].mxu0
      %809 = vmatprep.mubr.f32.mxu0 0.0
      %v810 = vand.u32 %v496, 4294901760
      %v811 = vsub.f32 %v496, %v810
      %812 = vmatmul.mubr.f32.gmra.mrb[0].mxu0 %v811
      %v813 = vpop.f32.mrb[0].mxu0
      %v814 = vadd.f32 %v713, %v813
      %v815 = vpop.f32.mrb[0].mxu0
      %816 = vdwg.mxu0
      %817 = vmatprep.subr.mxu0 0.0
      %v818 = vand.u32 %v453, 4294901760
      %819 = vmatpush1.msra.mxu0 %v818
      %820 = vmatprep.subr.mxu0 0.0
      %v821 = vand.u32 %v454, 4294901760
      %822 = vmatpush1.msra.mxu0 %v821
      %823 = vmatprep.subr.mxu0 0.0
      %v824 = vand.u32 %v455, 4294901760
      %825 = vmatpush1.msra.mxu0 %v824
      %826 = vmatprep.subr.mxu0 0.0
      %v827 = vand.u32 %v456, 4294901760
      %828 = vmatpush1.msra.mxu0 %v827
      %829 = vmatprep.subr.mxu0 0.0
      %830 = vmatpush1.msra.mxu0 0.0
      %831 = vmatprep.subr.mxu0 0.0
      %832 = vmatpush1.msra.mxu0 0.0
      %833 = vmatprep.subr.mxu0 0.0
      %834 = vmatpush1.msra.mxu0 0.0
      %835 = vmatprep.subr.mxu0 0.0
      %836 = vmatpush1.msra.mxu0 0.0
      %837 = vmatprep.subr.mxu0 0.0
      %838 = vmatpush1.msra.mxu0 0.0
      %839 = vmatprep.subr.mxu0 0.0
      %840 = vmatpush1.msra.mxu0 0.0
      %841 = vmatprep.subr.mxu0 0.0
      %842 = vmatpush1.msra.mxu0 0.0
      %843 = vmatprep.subr.mxu0 0.0
      %844 = vmatpush1.msra.mxu0 0.0
      %845 = vmatprep.subr.mxu0 0.0
      %846 = vmatpush1.msra.mxu0 0.0
      %847 = vmatprep.subr.mxu0 0.0
      %848 = vmatpush1.msra.mxu0 0.0
      %849 = vmatprep.subr.mxu0 0.0
      %850 = vmatpush1.msra.mxu0 0.0
      %851 = vmatprep.subr.mxu0 0.0
      %852 = vmatpush1.msra.mxu0 0.0
      %853 = vmatprep.subr.mxu0 0.0
      %854 = vmatpush1.msra.mxu0 0.0
      %855 = vmatprep.subr.mxu0 0.0
      %856 = vmatpush1.msra.mxu0 0.0
      %857 = vmatprep.subr.mxu0 0.0
      %858 = vmatpush1.msra.mxu0 0.0
      %859 = vmatprep.subr.mxu0 0.0
      %860 = vmatpush1.msra.mxu0 0.0
      %861 = vmatprep.subr.mxu0 0.0
      %862 = vmatpush1.msra.mxu0 0.0
      %863 = vmatprep.subr.mxu0 0.0
      %864 = vmatpush1.msra.mxu0 0.0
      %865 = vmatprep.subr.mxu0 0.0
      %866 = vmatpush1.msra.mxu0 0.0
      %867 = vmatprep.subr.mxu0 0.0
      %868 = vmatpush1.msra.mxu0 0.0
      %869 = vmatprep.subr.mxu0 0.0
      %870 = vmatpush1.msra.mxu0 0.0
      %871 = vmatprep.subr.mxu0 0.0
      %872 = vmatpush1.msra.mxu0 0.0
      %873 = vmatprep.subr.mxu0 0.0
      %874 = vmatpush1.msra.mxu0 0.0
      %875 = vmatprep.subr.mxu0 0.0
      %876 = vmatpush1.msra.mxu0 0.0
      %877 = vmatprep.subr.mxu0 0.0
      %878 = vmatpush1.msra.mxu0 0.0
      %879 = vmatprep.subr.mxu0 0.0
      %880 = vmatpush1.msra.mxu0 0.0
      %881 = vmatprep.subr.mxu0 0.0
      %882 = vmatpush1.msra.mxu0 0.0
      %883 = vmatprep.subr.mxu0 0.0
      %884 = vmatpush1.msra.mxu0 0.0
      %885 = vmatprep.mubr.f32.mxu0 0.0
      %v886 = vand.u32 %v487, 4294901760
      %v887 = vsub.f32 %v487, %v886
      %v888 = vand.u32 %v887, 4294901760
      %889 = vmatmul.mubr.f32.gmra.mrb[0].mxu0 %v888
      %v890 = vpop.f32.mrb[0].mxu0
      %v891 = vadd.f32 %v793, %v890
      %v892 = vpop.f32.mrb[0].mxu0
      %893 = vmatprep.mubr.f32.mxu0 0.0
      %v894 = vand.u32 %v490, 4294901760
      %v895 = vsub.f32 %v490, %v894
      %v896 = vand.u32 %v895, 4294901760
      %897 = vmatmul.mubr.f32.gmra.mrb[0].mxu0 %v896
      %v898 = vpop.f32.mrb[0].mxu0
      %v899 = vadd.f32 %v800, %v898
      %v900 = vpop.f32.mrb[0].mxu0
      %901 = vmatprep.mubr.f32.mxu0 0.0
      %v902 = vand.u32 %v493, 4294901760
      %v903 = vsub.f32 %v493, %v902
      %v904 = vand.u32 %v903, 4294901760
      %905 = vmatmul.mubr.f32.gmra.mrb[0].mxu0 %v904
      %v906 = vpop.f32.mrb[0].mxu0
      %v907 = vadd.f32 %v807, %v906
      %v908 = vpop.f32.mrb[0].mxu0
      %909 = vmatprep.mubr.f32.mxu0 0.0
      %v910 = vand.u32 %v496, 4294901760
      %v911 = vsub.f32 %v496, %v910
      %v912 = vand.u32 %v911, 4294901760
      %913 = vmatmul.mubr.f32.gmra.mrb[0].mxu0 %v912
      %v914 = vpop.f32.mrb[0].mxu0
      %v915 = vadd.f32 %v814, %v914
      %v916 = vpop.f32.mrb[0].mxu0
      %917 = vdwg.mxu0
      %918 = vmatprep.subr.mxu0 0.0
      %v919 = vand.u32 %v453, 4294901760
      %v920 = vsub.f32 %v453, %v919
      %v921 = vand.u32 %v920, 4294901760
      %922 = vmatpush1.msra.mxu0 %v921
      %923 = vmatprep.subr.mxu0 0.0
      %v924 = vand.u32 %v454, 4294901760
      %v925 = vsub.f32 %v454, %v924
      %v926 = vand.u32 %v925, 4294901760
      %927 = vmatpush1.msra.mxu0 %v926
      %928 = vmatprep.subr.mxu0 0.0
      %v929 = vand.u32 %v455, 4294901760
      %v930 = vsub.f32 %v455, %v929
      %v931 = vand.u32 %v930, 4294901760
      %932 = vmatpush1.msra.mxu0 %v931
      %933 = vmatprep.subr.mxu0 0.0
      %v934 = vand.u32 %v456, 4294901760
      %v935 = vsub.f32 %v456, %v934
      %v936 = vand.u32 %v935, 4294901760
      %937 = vmatpush1.msra.mxu0 %v936
      %938 = vmatprep.subr.mxu0 0.0
      %939 = vmatpush1.msra.mxu0 0.0
      %940 = vmatprep.subr.mxu0 0.0
      %941 = vmatpush1.msra.mxu0 0.0
      %942 = vmatprep.subr.mxu0 0.0
      %943 = vmatpush1.msra.mxu0 0.0
      %944 = vmatprep.subr.mxu0 0.0
      %945 = vmatpush1.msra.mxu0 0.0
      %946 = vmatprep.subr.mxu0 0.0
      %947 = vmatpush1.msra.mxu0 0.0
      %948 = vmatprep.subr.mxu0 0.0
      %949 = vmatpush1.msra.mxu0 0.0
      %950 = vmatprep.subr.mxu0 0.0
      %951 = vmatpush1.msra.mxu0 0.0
      %952 = vmatprep.subr.mxu0 0.0
      %953 = vmatpush1.msra.mxu0 0.0
      %954 = vmatprep.subr.mxu0 0.0
      %955 = vmatpush1.msra.mxu0 0.0
      %956 = vmatprep.subr.mxu0 0.0
      %957 = vmatpush1.msra.mxu0 0.0
      %958 = vmatprep.subr.mxu0 0.0
      %959 = vmatpush1.msra.mxu0 0.0
      %960 = vmatprep.subr.mxu0 0.0
      %961 = vmatpush1.msra.mxu0 0.0
      %962 = vmatprep.subr.mxu0 0.0
      %963 = vmatpush1.msra.mxu0 0.0
      %964 = vmatprep.subr.mxu0 0.0
      %965 = vmatpush1.msra.mxu0 0.0
      %966 = vmatprep.subr.mxu0 0.0
      %967 = vmatpush1.msra.mxu0 0.0
      %968 = vmatprep.subr.mxu0 0.0
      %969 = vmatpush1.msra.mxu0 0.0
      %970 = vmatprep.subr.mxu0 0.0
      %971 = vmatpush1.msra.mxu0 0.0
      %972 = vmatprep.subr.mxu0 0.0
      %973 = vmatpush1.msra.mxu0 0.0
      %974 = vmatprep.subr.mxu0 0.0
      %975 = vmatpush1.msra.mxu0 0.0
      %976 = vmatprep.subr.mxu0 0.0
      %977 = vmatpush1.msra.mxu0 0.0
      %978 = vmatprep.subr.mxu0 0.0
      %979 = vmatpush1.msra.mxu0 0.0
      %980 = vmatprep.subr.mxu0 0.0
      %981 = vmatpush1.msra.mxu0 0.0
      %982 = vmatprep.subr.mxu0 0.0
      %983 = vmatpush1.msra.mxu0 0.0
      %984 = vmatprep.subr.mxu0 0.0
      %985 = vmatpush1.msra.mxu0 0.0
      %986 = vmatprep.subr.mxu0 0.0
      %987 = vmatpush1.msra.mxu0 0.0
      %988 = vmatprep.subr.mxu0 0.0
      %989 = vmatpush1.msra.mxu0 0.0
      %990 = vmatprep.subr.mxu0 0.0
      %991 = vmatpush1.msra.mxu0 0.0
      %992 = vmatprep.subr.mxu0 0.0
      %993 = vmatpush1.msra.mxu0 0.0
      %994 = vmatprep.mubr.f32.mxu0 0.0
      %v995 = vand.u32 %v487, 4294901760
      %996 = vmatmul.mubr.f32.gmra.mrb[0].mxu0 %v995
      %v997 = vpop.f32.mrb[0].mxu0
      %v998 = vadd.f32 %v891, %v997
      %v999 = vpop.f32.mrb[0].mxu0
      %1000 = vmatprep.mubr.f32.mxu0 0.0
      %v1001 = vand.u32 %v490, 4294901760
      %1002 = vmatmul.mubr.f32.gmra.mrb[0].mxu0 %v1001
      %v1003 = vpop.f32.mrb[0].mxu0
      %v1004 = vadd.f32 %v899, %v1003
      %v1005 = vpop.f32.mrb[0].mxu0
      %1006 = vmatprep.mubr.f32.mxu0 0.0
      %v1007 = vand.u32 %v493, 4294901760
      %1008 = vmatmul.mubr.f32.gmra.mrb[0].mxu0 %v1007
      %v1009 = vpop.f32.mrb[0].mxu0
      %v1010 = vadd.f32 %v907, %v1009
      %v1011 = vpop.f32.mrb[0].mxu0
      %1012 = vmatprep.mubr.f32.mxu0 0.0
      %v1013 = vand.u32 %v496, 4294901760
      %1014 = vmatmul.mubr.f32.gmra.mrb[0].mxu0 %v1013
      %v1015 = vpop.f32.mrb[0].mxu0
      %v1016 = vadd.f32 %v915, %v1015
      %v1017 = vpop.f32.mrb[0].mxu0
      %1018 = vdwg.mxu0
      %1019 = vmatprep.subr.mxu0 0.0
      %v1020 = vand.u32 %v453, 4294901760
      %1021 = vmatpush1.msra.mxu0 %v1020
      %1022 = vmatprep.subr.mxu0 0.0
      %v1023 = vand.u32 %v454, 4294901760
      %1024 = vmatpush1.msra.mxu0 %v1023
      %1025 = vmatprep.subr.mxu0 0.0
      %v1026 = vand.u32 %v455, 4294901760
      %1027 = vmatpush1.msra.mxu0 %v1026
      %1028 = vmatprep.subr.mxu0 0.0
      %v1029 = vand.u32 %v456, 4294901760
      %1030 = vmatpush1.msra.mxu0 %v1029
      %1031 = vmatprep.subr.mxu0 0.0
      %1032 = vmatpush1.msra.mxu0 0.0
      %1033 = vmatprep.subr.mxu0 0.0
      %1034 = vmatpush1.msra.mxu0 0.0
      %1035 = vmatprep.subr.mxu0 0.0
      %1036 = vmatpush1.msra.mxu0 0.0
      %1037 = vmatprep.subr.mxu0 0.0
      %1038 = vmatpush1.msra.mxu0 0.0
      %1039 = vmatprep.subr.mxu0 0.0
      %1040 = vmatpush1.msra.mxu0 0.0
      %1041 = vmatprep.subr.mxu0 0.0
      %1042 = vmatpush1.msra.mxu0 0.0
      %1043 = vmatprep.subr.mxu0 0.0
      %1044 = vmatpush1.msra.mxu0 0.0
      %1045 = vmatprep.subr.mxu0 0.0
      %1046 = vmatpush1.msra.mxu0 0.0
      %1047 = vmatprep.subr.mxu0 0.0
      %1048 = vmatpush1.msra.mxu0 0.0
      %1049 = vmatprep.subr.mxu0 0.0
      %1050 = vmatpush1.msra.mxu0 0.0
      %1051 = vmatprep.subr.mxu0 0.0
      %1052 = vmatpush1.msra.mxu0 0.0
      %1053 = vmatprep.subr.mxu0 0.0
      %1054 = vmatpush1.msra.mxu0 0.0
      %1055 = vmatprep.subr.mxu0 0.0
      %1056 = vmatpush1.msra.mxu0 0.0
      %1057 = vmatprep.subr.mxu0 0.0
      %1058 = vmatpush1.msra.mxu0 0.0
      %1059 = vmatprep.subr.mxu0 0.0
      %1060 = vmatpush1.msra.mxu0 0.0
      %1061 = vmatprep.subr.mxu0 0.0
      %1062 = vmatpush1.msra.mxu0 0.0
      %1063 = vmatprep.subr.mxu0 0.0
      %1064 = vmatpush1.msra.mxu0 0.0
      %1065 = vmatprep.subr.mxu0 0.0
      %1066 = vmatpush1.msra.mxu0 0.0
      %1067 = vmatprep.subr.mxu0 0.0
      %1068 = vmatpush1.msra.mxu0 0.0
      %1069 = vmatprep.subr.mxu0 0.0
      %1070 = vmatpush1.msra.mxu0 0.0
      %1071 = vmatprep.subr.mxu0 0.0
      %1072 = vmatpush1.msra.mxu0 0.0
      %1073 = vmatprep.subr.mxu0 0.0
      %1074 = vmatpush1.msra.mxu0 0.0
      %1075 = vmatprep.subr.mxu0 0.0
      %1076 = vmatpush1.msra.mxu0 0.0
      %1077 = vmatprep.subr.mxu0 0.0
      %1078 = vmatpush1.msra.mxu0 0.0
      %1079 = vmatprep.subr.mxu0 0.0
      %1080 = vmatpush1.msra.mxu0 0.0
      %1081 = vmatprep.subr.mxu0 0.0
      %1082 = vmatpush1.msra.mxu0 0.0
      %1083 = vmatprep.subr.mxu0 0.0
      %1084 = vmatpush1.msra.mxu0 0.0
      %1085 = vmatprep.subr.mxu0 0.0
      %1086 = vmatpush1.msra.mxu0 0.0
      %1087 = vmatprep.mubr.f32.mxu0 0.0
      %v1088 = vand.u32 %v487, 4294901760
      %1089 = vmatmul.mubr.f32.gmra.mrb[0].mxu0 %v1088
      %v1090 = vpop.f32.mrb[0].mxu0
      %v1091 = vadd.f32 %v998, %v1090
      %v1092 = vpop.f32.mrb[0].mxu0
      %1093 = vmatprep.mubr.f32.mxu0 0.0
      %v1094 = vand.u32 %v490, 4294901760
      %1095 = vmatmul.mubr.f32.gmra.mrb[0].mxu0 %v1094
      %v1096 = vpop.f32.mrb[0].mxu0
      %v1097 = vadd.f32 %v1004, %v1096
      %v1098 = vpop.f32.mrb[0].mxu0
      %1099 = vmatprep.mubr.f32.mxu0 0.0
      %v1100 = vand.u32 %v493, 4294901760
      %1101 = vmatmul.mubr.f32.gmra.mrb[0].mxu0 %v1100
      %v1102 = vpop.f32.mrb[0].mxu0
      %v1103 = vadd.f32 %v1010, %v1102
      %v1104 = vpop.f32.mrb[0].mxu0
      %1105 = vmatprep.mubr.f32.mxu0 0.0
      %v1106 = vand.u32 %v496, 4294901760
      %1107 = vmatmul.mubr.f32.gmra.mrb[0].mxu0 %v1106
      %v1108 = vpop.f32.mrb[0].mxu0
      %v1109 = vadd.f32 %v1016, %v1108
      %v1110 = vpop.f32.mrb[0].mxu0
      %1111 = vdwg.mxu0
      %v1112 = vtanh.pop %v1091
      %v1113 = vtanh.pop %v1097
      %v1114 = vtanh.pop %v1103
      %v1115 = vtanh.pop %v1109
      %v1116 = vld [vmem:[%s6] sm:$0xff]
      %v1117 = vld [vmem:[%s6 + $0x8] sm:$0xff]
      %v1118 = vld [vmem:[%s6 + $0x10] sm:$0xff]
      %v1119 = vld [vmem:[%s6 + $0x18] sm:$0xff]
      %v1120 = vld [vmem:[%s7] sm:$0xff]
      %v1121 = vld [vmem:[%s7 + $0x8] sm:$0xff]
      %v1122 = vld [vmem:[%s7 + $0x10] sm:$0xff]
      %v1123 = vld [vmem:[%s7 + $0x18] sm:$0xff]
      %1125 = vset.pattern.permute.xlu0 0
      %1126 = vperm.xlu0 %1125, %v1120
      %v1127 = vpop.permute.xlu0 %1126
      %1130 = vset.pattern.permute.xlu0 0
      %1131 = vperm.xlu0 %1130, %v1121
      %v1132 = vpop.permute.xlu0 %1131
      %1135 = vset.pattern.permute.xlu0 0
      %1136 = vperm.xlu0 %1135, %v1122
      %v1137 = vpop.permute.xlu0 %1136
      %1140 = vset.pattern.permute.xlu0 0
      %1141 = vperm.xlu0 %1140, %v1123
      %v1142 = vpop.permute.xlu0 %1141
      %v1145 = vsel %vm485, %v1116, 0
      %v1148 = vsel %vm485, %v1117, 0
      %v1151 = vsel %vm485, %v1118, 0
      %v1154 = vsel %vm485, %v1119, 0
      %1156 = vmatprep.subr.mxu0 0.0
      %v1157 = vand.u32 %v1112, 4294901760
      %1158 = vmatpush1.msra.mxu0 %v1157
      %1159 = vmatprep.subr.mxu0 0.0
      %v1160 = vand.u32 %v1113, 4294901760
      %1161 = vmatpush1.msra.mxu0 %v1160
      %1162 = vmatprep.subr.mxu0 0.0
      %v1163 = vand.u32 %v1114, 4294901760
      %1164 = vmatpush1.msra.mxu0 %v1163
      %1165 = vmatprep.subr.mxu0 0.0
      %v1166 = vand.u32 %v1115, 4294901760
      %1167 = vmatpush1.msra.mxu0 %v1166
      %1168 = vmatprep.subr.mxu0 0.0
      %1169 = vmatpush1.msra.mxu0 0.0
      %1170 = vmatprep.subr.mxu0 0.0
      %1171 = vmatpush1.msra.mxu0 0.0
      %1172 = vmatprep.subr.mxu0 0.0
      %1173 = vmatpush1.msra.mxu0 0.0
      %1174 = vmatprep.subr.mxu0 0.0
      %1175 = vmatpush1.msra.mxu0 0.0
      %1176 = vmatprep.subr.mxu0 0.0
      %1177 = vmatpush1.msra.mxu0 0.0
      %1178 = vmatprep.subr.mxu0 0.0
      %1179 = vmatpush1.msra.mxu0 0.0
      %1180 = vmatprep.subr.mxu0 0.0
      %1181 = vmatpush1.msra.mxu0 0.0
      %1182 = vmatprep.subr.mxu0 0.0
      %1183 = vmatpush1.msra.mxu0 0.0
      %1184 = vmatprep.subr.mxu0 0.0
      %1185 = vmatpush1.msra.mxu0 0.0
      %1186 = vmatprep.subr.mxu0 0.0
      %1187 = vmatpush1.msra.mxu0 0.0
      %1188 = vmatprep.subr.mxu0 0.0
      %1189 = vmatpush1.msra.mxu0 0.0
      %1190 = vmatprep.subr.mxu0 0.0
      %1191 = vmatpush1.msra.mxu0 0.0
      %1192 = vmatprep.subr.mxu0 0.0
      %1193 = vmatpush1.msra.mxu0 0.0
      %1194 = vmatprep.subr.mxu0 0.0
      %1195 = vmatpush1.msra.mxu0 0.0
      %1196 = vmatprep.subr.mxu0 0.0
      %1197 = vmatpush1.msra.mxu0 0.0
      %1198 = vmatprep.subr.mxu0 0.0
      %1199 = vmatpush1.msra.mxu0 0.0
      %1200 = vmatprep.subr.mxu0 0.0
      %1201 = vmatpush1.msra.mxu0 0.0
      %1202 = vmatprep.subr.mxu0 0.0
      %1203 = vmatpush1.msra.mxu0 0.0
      %1204 = vmatprep.subr.mxu0 0.0
      %1205 = vmatpush1.msra.mxu0 0.0
      %1206 = vmatprep.subr.mxu0 0.0
      %1207 = vmatpush1.msra.mxu0 0.0
      %1208 = vmatprep.subr.mxu0 0.0
      %1209 = vmatpush1.msra.mxu0 0.0
      %1210 = vmatprep.subr.mxu0 0.0
      %1211 = vmatpush1.msra.mxu0 0.0
      %1212 = vmatprep.subr.mxu0 0.0
      %1213 = vmatpush1.msra.mxu0 0.0
      %1214 = vmatprep.subr.mxu0 0.0
      %1215 = vmatpush1.msra.mxu0 0.0
      %1216 = vmatprep.subr.mxu0 0.0
      %1217 = vmatpush1.msra.mxu0 0.0
      %1218 = vmatprep.subr.mxu0 0.0
      %1219 = vmatpush1.msra.mxu0 0.0
      %1220 = vmatprep.subr.mxu0 0.0
      %1221 = vmatpush1.msra.mxu0 0.0
      %1222 = vmatprep.subr.mxu0 0.0
      %1223 = vmatpush1.msra.mxu0 0.0
      %1224 = vmatprep.mubr.f32.mxu0 0.0
      %v1225 = vand.u32 %v1145, 4294901760
      %v1226 = vsub.f32 %v1145, %v1225
      %v1227 = vand.u32 %v1226, 4294901760
      %v1228 = vsub.f32 %v1226, %v1227
      %v1229 = vand.u32 %v1228, 4294901760
      %1230 = vmatmul.mubr.f32.gmra.mrb[0].mxu0 %v1229
      %v1231 = vpop.f32.mrb[0].mxu0
      %v1232 = vadd.f32 %v1127, %v1231
      %v1233 = vpop.f32.mrb[0].mxu0
      %1234 = vmatprep.mubr.f32.mxu0 0.0
      %v1235 = vand.u32 %v1148, 4294901760
      %v1236 = vsub.f32 %v1148, %v1235
      %v1237 = vand.u32 %v1236, 4294901760
      %v1238 = vsub.f32 %v1236, %v1237
      %v1239 = vand.u32 %v1238, 4294901760
      %1240 = vmatmul.mubr.f32.gmra.mrb[0].mxu0 %v1239
      %v1241 = vpop.f32.mrb[0].mxu0
      %v1242 = vadd.f32 %v1132, %v1241
      %v1243 = vpop.f32.mrb[0].mxu0
      %1244 = vmatprep.mubr.f32.mxu0 0.0
      %v1245 = vand.u32 %v1151, 4294901760
      %v1246 = vsub.f32 %v1151, %v1245
      %v1247 = vand.u32 %v1246, 4294901760
      %v1248 = vsub.f32 %v1246, %v1247
      %v1249 = vand.u32 %v1248, 4294901760
      %1250 = vmatmul.mubr.f32.gmra.mrb[0].mxu0 %v1249
      %v1251 = vpop.f32.mrb[0].mxu0
      %v1252 = vadd.f32 %v1137, %v1251
      %v1253 = vpop.f32.mrb[0].mxu0
      %1254 = vmatprep.mubr.f32.mxu0 0.0
      %v1255 = vand.u32 %v1154, 4294901760
      %v1256 = vsub.f32 %v1154, %v1255
      %v1257 = vand.u32 %v1256, 4294901760
      %v1258 = vsub.f32 %v1256, %v1257
      %v1259 = vand.u32 %v1258, 4294901760
      %1260 = vmatmul.mubr.f32.gmra.mrb[0].mxu0 %v1259
      %v1261 = vpop.f32.mrb[0].mxu0
      %v1262 = vadd.f32 %v1142, %v1261
      %v1263 = vpop.f32.mrb[0].mxu0
      %1264 = vdwg.mxu0
      %1265 = vmatprep.subr.mxu0 0.0
      %v1266 = vand.u32 %v1112, 4294901760
      %v1267 = vsub.f32 %v1112, %v1266
      %v1268 = vand.u32 %v1267, 4294901760
      %v1269 = vsub.f32 %v1267, %v1268
      %v1270 = vand.u32 %v1269, 4294901760
      %1271 = vmatpush1.msra.mxu0 %v1270
      %1272 = vmatprep.subr.mxu0 0.0
      %v1273 = vand.u32 %v1113, 4294901760
      %v1274 = vsub.f32 %v1113, %v1273
      %v1275 = vand.u32 %v1274, 4294901760
      %v1276 = vsub.f32 %v1274, %v1275
      %v1277 = vand.u32 %v1276, 4294901760
      %1278 = vmatpush1.msra.mxu0 %v1277
      %1279 = vmatprep.subr.mxu0 0.0
      %v1280 = vand.u32 %v1114, 4294901760
      %v1281 = vsub.f32 %v1114, %v1280
      %v1282 = vand.u32 %v1281, 4294901760
      %v1283 = vsub.f32 %v1281, %v1282
      %v1284 = vand.u32 %v1283, 4294901760
      %1285 = vmatpush1.msra.mxu0 %v1284
      %1286 = vmatprep.subr.mxu0 0.0
      %v1287 = vand.u32 %v1115, 4294901760
      %v1288 = vsub.f32 %v1115, %v1287
      %v1289 = vand.u32 %v1288, 4294901760
      %v1290 = vsub.f32 %v1288, %v1289
      %v1291 = vand.u32 %v1290, 4294901760
      %1292 = vmatpush1.msra.mxu0 %v1291
      %1293 = vmatprep.subr.mxu0 0.0
      %1294 = vmatpush1.msra.mxu0 0.0
      %1295 = vmatprep.subr.mxu0 0.0
      %1296 = vmatpush1.msra.mxu0 0.0
      %1297 = vmatprep.subr.mxu0 0.0
      %1298 = vmatpush1.msra.mxu0 0.0
      %1299 = vmatprep.subr.mxu0 0.0
      %1300 = vmatpush1.msra.mxu0 0.0
      %1301 = vmatprep.subr.mxu0 0.0
      %1302 = vmatpush1.msra.mxu0 0.0
      %1303 = vmatprep.subr.mxu0 0.0
      %1304 = vmatpush1.msra.mxu0 0.0
      %1305 = vmatprep.subr.mxu0 0.0
      %1306 = vmatpush1.msra.mxu0 0.0
      %1307 = vmatprep.subr.mxu0 0.0
      %1308 = vmatpush1.msra.mxu0 0.0
      %1309 = vmatprep.subr.mxu0 0.0
      %1310 = vmatpush1.msra.mxu0 0.0
      %1311 = vmatprep.subr.mxu0 0.0
      %1312 = vmatpush1.msra.mxu0 0.0
      %1313 = vmatprep.subr.mxu0 0.0
      %1314 = vmatpush1.msra.mxu0 0.0
      %1315 = vmatprep.subr.mxu0 0.0
      %1316 = vmatpush1.msra.mxu0 0.0
      %1317 = vmatprep.subr.mxu0 0.0
      %1318 = vmatpush1.msra.mxu0 0.0
      %1319 = vmatprep.subr.mxu0 0.0
      %1320 = vmatpush1.msra.mxu0 0.0
      %1321 = vmatprep.subr.mxu0 0.0
      %1322 = vmatpush1.msra.mxu0 0.0
      %1323 = vmatprep.subr.mxu0 0.0
      %1324 = vmatpush1.msra.mxu0 0.0
      %1325 = vmatprep.subr.mxu0 0.0
      %1326 = vmatpush1.msra.mxu0 0.0
      %1327 = vmatprep.subr.mxu0 0.0
      %1328 = vmatpush1.msra.mxu0 0.0
      %1329 = vmatprep.subr.mxu0 0.0
      %1330 = vmatpush1.msra.mxu0 0.0
      %1331 = vmatprep.subr.mxu0 0.0
      %1332 = vmatpush1.msra.mxu0 0.0
      %1333 = vmatprep.subr.mxu0 0.0
      %1334 = vmatpush1.msra.mxu0 0.0
      %1335 = vmatprep.subr.mxu0 0.0
      %1336 = vmatpush1.msra.mxu0 0.0
      %1337 = vmatprep.subr.mxu0 0.0
      %1338 = vmatpush1.msra.mxu0 0.0
      %1339 = vmatprep.subr.mxu0 0.0
      %1340 = vmatpush1.msra.mxu0 0.0
      %1341 = vmatprep.subr.mxu0 0.0
      %1342 = vmatpush1.msra.mxu0 0.0
      %1343 = vmatprep.subr.mxu0 0.0
      %1344 = vmatpush1.msra.mxu0 0.0
      %1345 = vmatprep.subr.mxu0 0.0
      %1346 = vmatpush1.msra.mxu0 0.0
      %1347 = vmatprep.subr.mxu0 0.0
      %1348 = vmatpush1.msra.mxu0 0.0
      %1349 = vmatprep.mubr.f32.mxu0 0.0
      %v1350 = vand.u32 %v1145, 4294901760
      %1351 = vmatmul.mubr.f32.gmra.mrb[0].mxu0 %v1350
      %v1352 = vpop.f32.mrb[0].mxu0
      %v1353 = vadd.f32 %v1232, %v1352
      %v1354 = vpop.f32.mrb[0].mxu0
      %1355 = vmatprep.mubr.f32.mxu0 0.0
      %v1356 = vand.u32 %v1148, 4294901760
      %1357 = vmatmul.mubr.f32.gmra.mrb[0].mxu0 %v1356
      %v1358 = vpop.f32.mrb[0].mxu0
      %v1359 = vadd.f32 %v1242, %v1358
      %v1360 = vpop.f32.mrb[0].mxu0
      %1361 = vmatprep.mubr.f32.mxu0 0.0
      %v1362 = vand.u32 %v1151, 4294901760
      %1363 = vmatmul.mubr.f32.gmra.mrb[0].mxu0 %v1362
      %v1364 = vpop.f32.mrb[0].mxu0
      %v1365 = vadd.f32 %v1252, %v1364
      %v1366 = vpop.f32.mrb[0].mxu0
      %1367 = vmatprep.mubr.f32.mxu0 0.0
      %v1368 = vand.u32 %v1154, 4294901760
      %1369 = vmatmul.mubr.f32.gmra.mrb[0].mxu0 %v1368
      %v1370 = vpop.f32.mrb[0].mxu0
      %v1371 = vadd.f32 %v1262, %v1370
      %v1372 = vpop.f32.mrb[0].mxu0
      %1373 = vdwg.mxu0
      %1374 = vmatprep.subr.mxu0 0.0
      %v1375 = vand.u32 %v1112, 4294901760
      %v1376 = vsub.f32 %v1112, %v1375
      %1377 = vmatpush1.msra.mxu0 %v1376
      %1378 = vmatprep.subr.mxu0 0.0
      %v1379 = vand.u32 %v1113, 4294901760
      %v1380 = vsub.f32 %v1113, %v1379
      %1381 = vmatpush1.msra.mxu0 %v1380
      %1382 = vmatprep.subr.mxu0 0.0
      %v1383 = vand.u32 %v1114, 4294901760
      %v1384 = vsub.f32 %v1114, %v1383
      %1385 = vmatpush1.msra.mxu0 %v1384
      %1386 = vmatprep.subr.mxu0 0.0
      %v1387 = vand.u32 %v1115, 4294901760
      %v1388 = vsub.f32 %v1115, %v1387
      %1389 = vmatpush1.msra.mxu0 %v1388
      %1390 = vmatprep.subr.mxu0 0.0
      %1391 = vmatpush1.msra.mxu0 0.0
      %1392 = vmatprep.subr.mxu0 0.0
      %1393 = vmatpush1.msra.mxu0 0.0
      %1394 = vmatprep.subr.mxu0 0.0
      %1395 = vmatpush1.msra.mxu0 0.0
      %1396 = vmatprep.subr.mxu0 0.0
      %1397 = vmatpush1.msra.mxu0 0.0
      %1398 = vmatprep.subr.mxu0 0.0
      %1399 = vmatpush1.msra.mxu0 0.0
      %1400 = vmatprep.subr.mxu0 0.0
      %1401 = vmatpush1.msra.mxu0 0.0
      %1402 = vmatprep.subr.mxu0 0.0
      %1403 = vmatpush1.msra.mxu0 0.0
      %1404 = vmatprep.subr.mxu0 0.0
      %1405 = vmatpush1.msra.mxu0 0.0
      %1406 = vmatprep.subr.mxu0 0.0
      %1407 = vmatpush1.msra.mxu0 0.0
      %1408 = vmatprep.subr.mxu0 0.0
      %1409 = vmatpush1.msra.mxu0 0.0
      %1410 = vmatprep.subr.mxu0 0.0
      %1411 = vmatpush1.msra.mxu0 0.0
      %1412 = vmatprep.subr.mxu0 0.0
      %1413 = vmatpush1.msra.mxu0 0.0
      %1414 = vmatprep.subr.mxu0 0.0
      %1415 = vmatpush1.msra.mxu0 0.0
      %1416 = vmatprep.subr.mxu0 0.0
      %1417 = vmatpush1.msra.mxu0 0.0
      %1418 = vmatprep.subr.mxu0 0.0
      %1419 = vmatpush1.msra.mxu0 0.0
      %1420 = vmatprep.subr.mxu0 0.0
      %1421 = vmatpush1.msra.mxu0 0.0
      %1422 = vmatprep.subr.mxu0 0.0
      %1423 = vmatpush1.msra.mxu0 0.0
      %1424 = vmatprep.subr.mxu0 0.0
      %1425 = vmatpush1.msra.mxu0 0.0
      %1426 = vmatprep.subr.mxu0 0.0
      %1427 = vmatpush1.msra.mxu0 0.0
      %1428 = vmatprep.subr.mxu0 0.0
      %1429 = vmatpush1.msra.mxu0 0.0
      %1430 = vmatprep.subr.mxu0 0.0
      %1431 = vmatpush1.msra.mxu0 0.0
      %1432 = vmatprep.subr.mxu0 0.0
      %1433 = vmatpush1.msra.mxu0 0.0
      %1434 = vmatprep.subr.mxu0 0.0
      %1435 = vmatpush1.msra.mxu0 0.0
      %1436 = vmatprep.subr.mxu0 0.0
      %1437 = vmatpush1.msra.mxu0 0.0
      %1438 = vmatprep.subr.mxu0 0.0
      %1439 = vmatpush1.msra.mxu0 0.0
      %1440 = vmatprep.subr.mxu0 0.0
      %1441 = vmatpush1.msra.mxu0 0.0
      %1442 = vmatprep.subr.mxu0 0.0
      %1443 = vmatpush1.msra.mxu0 0.0
      %1444 = vmatprep.subr.mxu0 0.0
      %1445 = vmatpush1.msra.mxu0 0.0
      %1446 = vmatprep.mubr.f32.mxu0 0.0
      %v1447 = vand.u32 %v1145, 4294901760
      %v1448 = vsub.f32 %v1145, %v1447
      %1449 = vmatmul.mubr.f32.gmra.mrb[0].mxu0 %v1448
      %v1450 = vpop.f32.mrb[0].mxu0
      %v1451 = vadd.f32 %v1353, %v1450
      %v1452 = vpop.f32.mrb[0].mxu0
      %1453 = vmatprep.mubr.f32.mxu0 0.0
      %v1454 = vand.u32 %v1148, 4294901760
      %v1455 = vsub.f32 %v1148, %v1454
      %1456 = vmatmul.mubr.f32.gmra.mrb[0].mxu0 %v1455
      %v1457 = vpop.f32.mrb[0].mxu0
      %v1458 = vadd.f32 %v1359, %v1457
      %v1459 = vpop.f32.mrb[0].mxu0
      %1460 = vmatprep.mubr.f32.mxu0 0.0
      %v1461 = vand.u32 %v1151, 4294901760
      %v1462 = vsub.f32 %v1151, %v1461
      %1463 = vmatmul.mubr.f32.gmra.mrb[0].mxu0 %v1462
      %v1464 = vpop.f32.mrb[0].mxu0
      %v1465 = vadd.f32 %v1365, %v1464
      %v1466 = vpop.f32.mrb[0].mxu0
      %1467 = vmatprep.mubr.f32.mxu0 0.0
      %v1468 = vand.u32 %v1154, 4294901760
      %v1469 = vsub.f32 %v1154, %v1468
      %1470 = vmatmul.mubr.f32.gmra.mrb[0].mxu0 %v1469
      %v1471 = vpop.f32.mrb[0].mxu0
      %v1472 = vadd.f32 %v1371, %v1471
      %v1473 = vpop.f32.mrb[0].mxu0
      %1474 = vdwg.mxu0
      %1475 = vmatprep.subr.mxu0 0.0
      %v1476 = vand.u32 %v1112, 4294901760
      %1477 = vmatpush1.msra.mxu0 %v1476
      %1478 = vmatprep.subr.mxu0 0.0
      %v1479 = vand.u32 %v1113, 4294901760
      %1480 = vmatpush1.msra.mxu0 %v1479
      %1481 = vmatprep.subr.mxu0 0.0
      %v1482 = vand.u32 %v1114, 4294901760
      %1483 = vmatpush1.msra.mxu0 %v1482
      %1484 = vmatprep.subr.mxu0 0.0
      %v1485 = vand.u32 %v1115, 4294901760
      %1486 = vmatpush1.msra.mxu0 %v1485
      %1487 = vmatprep.subr.mxu0 0.0
      %1488 = vmatpush1.msra.mxu0 0.0
      %1489 = vmatprep.subr.mxu0 0.0
      %1490 = vmatpush1.msra.mxu0 0.0
      %1491 = vmatprep.subr.mxu0 0.0
      %1492 = vmatpush1.msra.mxu0 0.0
      %1493 = vmatprep.subr.mxu0 0.0
      %1494 = vmatpush1.msra.mxu0 0.0
      %1495 = vmatprep.subr.mxu0 0.0
      %1496 = vmatpush1.msra.mxu0 0.0
      %1497 = vmatprep.subr.mxu0 0.0
      %1498 = vmatpush1.msra.mxu0 0.0
      %1499 = vmatprep.subr.mxu0 0.0
      %1500 = vmatpush1.msra.mxu0 0.0
      %1501 = vmatprep.subr.mxu0 0.0
      %1502 = vmatpush1.msra.mxu0 0.0
      %1503 = vmatprep.subr.mxu0 0.0
      %1504 = vmatpush1.msra.mxu0 0.0
      %1505 = vmatprep.subr.mxu0 0.0
      %1506 = vmatpush1.msra.mxu0 0.0
      %1507 = vmatprep.subr.mxu0 0.0
      %1508 = vmatpush1.msra.mxu0 0.0
      %1509 = vmatprep.subr.mxu0 0.0
      %1510 = vmatpush1.msra.mxu0 0.0
      %1511 = vmatprep.subr.mxu0 0.0
      %1512 = vmatpush1.msra.mxu0 0.0
      %1513 = vmatprep.subr.mxu0 0.0
      %1514 = vmatpush1.msra.mxu0 0.0
      %1515 = vmatprep.subr.mxu0 0.0
      %1516 = vmatpush1.msra.mxu0 0.0
      %1517 = vmatprep.subr.mxu0 0.0
      %1518 = vmatpush1.msra.mxu0 0.0
      %1519 = vmatprep.subr.mxu0 0.0
      %1520 = vmatpush1.msra.mxu0 0.0
      %1521 = vmatprep.subr.mxu0 0.0
      %1522 = vmatpush1.msra.mxu0 0.0
      %1523 = vmatprep.subr.mxu0 0.0
      %1524 = vmatpush1.msra.mxu0 0.0
      %1525 = vmatprep.subr.mxu0 0.0
      %1526 = vmatpush1.msra.mxu0 0.0
      %1527 = vmatprep.subr.mxu0 0.0
      %1528 = vmatpush1.msra.mxu0 0.0
      %1529 = vmatprep.subr.mxu0 0.0
      %1530 = vmatpush1.msra.mxu0 0.0
      %1531 = vmatprep.subr.mxu0 0.0
      %1532 = vmatpush1.msra.mxu0 0.0
      %1533 = vmatprep.subr.mxu0 0.0
      %1534 = vmatpush1.msra.mxu0 0.0
      %1535 = vmatprep.subr.mxu0 0.0
      %1536 = vmatpush1.msra.mxu0 0.0
      %1537 = vmatprep.subr.mxu0 0.0
      %1538 = vmatpush1.msra.mxu0 0.0
      %1539 = vmatprep.subr.mxu0 0.0
      %1540 = vmatpush1.msra.mxu0 0.0
      %1541 = vmatprep.subr.mxu0 0.0
      %1542 = vmatpush1.msra.mxu0 0.0
      %1543 = vmatprep.mubr.f32.mxu0 0.0
      %v1544 = vand.u32 %v1145, 4294901760
      %v1545 = vsub.f32 %v1145, %v1544
      %v1546 = vand.u32 %v1545, 4294901760
      %1547 = vmatmul.mubr.f32.gmra.mrb[0].mxu0 %v1546
      %v1548 = vpop.f32.mrb[0].mxu0
      %v1549 = vadd.f32 %v1451, %v1548
      %v1550 = vpop.f32.mrb[0].mxu0
      %1551 = vmatprep.mubr.f32.mxu0 0.0
      %v1552 = vand.u32 %v1148, 4294901760
      %v1553 = vsub.f32 %v1148, %v1552
      %v1554 = vand.u32 %v1553, 4294901760
      %1555 = vmatmul.mubr.f32.gmra.mrb[0].mxu0 %v1554
      %v1556 = vpop.f32.mrb[0].mxu0
      %v1557 = vadd.f32 %v1458, %v1556
      %v1558 = vpop.f32.mrb[0].mxu0
      %1559 = vmatprep.mubr.f32.mxu0 0.0
      %v1560 = vand.u32 %v1151, 4294901760
      %v1561 = vsub.f32 %v1151, %v1560
      %v1562 = vand.u32 %v1561, 4294901760
      %1563 = vmatmul.mubr.f32.gmra.mrb[0].mxu0 %v1562
      %v1564 = vpop.f32.mrb[0].mxu0
      %v1565 = vadd.f32 %v1465, %v1564
      %v1566 = vpop.f32.mrb[0].mxu0
      %1567 = vmatprep.mubr.f32.mxu0 0.0
      %v1568 = vand.u32 %v1154, 4294901760
      %v1569 = vsub.f32 %v1154, %v1568
      %v1570 = vand.u32 %v1569, 4294901760
      %1571 = vmatmul.mubr.f32.gmra.mrb[0].mxu0 %v1570
      %v1572 = vpop.f32.mrb[0].mxu0
      %v1573 = vadd.f32 %v1472, %v1572
      %v1574 = vpop.f32.mrb[0].mxu0
      %1575 = vdwg.mxu0
      %1576 = vmatprep.subr.mxu0 0.0
      %v1577 = vand.u32 %v1112, 4294901760
      %v1578 = vsub.f32 %v1112, %v1577
      %v1579 = vand.u32 %v1578, 4294901760
      %1580 = vmatpush1.msra.mxu0 %v1579
      %1581 = vmatprep.subr.mxu0 0.0
      %v1582 = vand.u32 %v1113, 4294901760
      %v1583 = vsub.f32 %v1113, %v1582
      %v1584 = vand.u32 %v1583, 4294901760
      %1585 = vmatpush1.msra.mxu0 %v1584
      %1586 = vmatprep.subr.mxu0 0.0
      %v1587 = vand.u32 %v1114, 4294901760
      %v1588 = vsub.f32 %v1114, %v1587
      %v1589 = vand.u32 %v1588, 4294901760
      %1590 = vmatpush1.msra.mxu0 %v1589
      %1591 = vmatprep.subr.mxu0 0.0
      %v1592 = vand.u32 %v1115, 4294901760
      %v1593 = vsub.f32 %v1115, %v1592
      %v1594 = vand.u32 %v1593, 4294901760
      %1595 = vmatpush1.msra.mxu0 %v1594
      %1596 = vmatprep.subr.mxu0 0.0
      %1597 = vmatpush1.msra.mxu0 0.0
      %1598 = vmatprep.subr.mxu0 0.0
      %1599 = vmatpush1.msra.mxu0 0.0
      %1600 = vmatprep.subr.mxu0 0.0
      %1601 = vmatpush1.msra.mxu0 0.0
      %1602 = vmatprep.subr.mxu0 0.0
      %1603 = vmatpush1.msra.mxu0 0.0
      %1604 = vmatprep.subr.mxu0 0.0
      %1605 = vmatpush1.msra.mxu0 0.0
      %1606 = vmatprep.subr.mxu0 0.0
      %1607 = vmatpush1.msra.mxu0 0.0
      %1608 = vmatprep.subr.mxu0 0.0
      %1609 = vmatpush1.msra.mxu0 0.0
      %1610 = vmatprep.subr.mxu0 0.0
      %1611 = vmatpush1.msra.mxu0 0.0
      %1612 = vmatprep.subr.mxu0 0.0
      %1613 = vmatpush1.msra.mxu0 0.0
      %1614 = vmatprep.subr.mxu0 0.0
      %1615 = vmatpush1.msra.mxu0 0.0
      %1616 = vmatprep.subr.mxu0 0.0
      %1617 = vmatpush1.msra.mxu0 0.0
      %1618 = vmatprep.subr.mxu0 0.0
      %1619 = vmatpush1.msra.mxu0 0.0
      %1620 = vmatprep.subr.mxu0 0.0
      %1621 = vmatpush1.msra.mxu0 0.0
      %1622 = vmatprep.subr.mxu0 0.0
      %1623 = vmatpush1.msra.mxu0 0.0
      %1624 = vmatprep.subr.mxu0 0.0
      %1625 = vmatpush1.msra.mxu0 0.0
      %1626 = vmatprep.subr.mxu0 0.0
      %1627 = vmatpush1.msra.mxu0 0.0
      %1628 = vmatprep.subr.mxu0 0.0
      %1629 = vmatpush1.msra.mxu0 0.0
      %1630 = vmatprep.subr.mxu0 0.0
      %1631 = vmatpush1.msra.mxu0 0.0
      %1632 = vmatprep.subr.mxu0 0.0
      %1633 = vmatpush1.msra.mxu0 0.0
      %1634 = vmatprep.subr.mxu0 0.0
      %1635 = vmatpush1.msra.mxu0 0.0
      %1636 = vmatprep.subr.mxu0 0.0
      %1637 = vmatpush1.msra.mxu0 0.0
      %1638 = vmatprep.subr.mxu0 0.0
      %1639 = vmatpush1.msra.mxu0 0.0
      %1640 = vmatprep.subr.mxu0 0.0
      %1641 = vmatpush1.msra.mxu0 0.0
      %1642 = vmatprep.subr.mxu0 0.0
      %1643 = vmatpush1.msra.mxu0 0.0
      %1644 = vmatprep.subr.mxu0 0.0
      %1645 = vmatpush1.msra.mxu0 0.0
      %1646 = vmatprep.subr.mxu0 0.0
      %1647 = vmatpush1.msra.mxu0 0.0
      %1648 = vmatprep.subr.mxu0 0.0
      %1649 = vmatpush1.msra.mxu0 0.0
      %1650 = vmatprep.subr.mxu0 0.0
      %1651 = vmatpush1.msra.mxu0 0.0
      %1652 = vmatprep.mubr.f32.mxu0 0.0
      %v1653 = vand.u32 %v1145, 4294901760
      %1654 = vmatmul.mubr.f32.gmra.mrb[0].mxu0 %v1653
      %v1655 = vpop.f32.mrb[0].mxu0
      %v1656 = vadd.f32 %v1549, %v1655
      %v1657 = vpop.f32.mrb[0].mxu0
      %1658 = vmatprep.mubr.f32.mxu0 0.0
      %v1659 = vand.u32 %v1148, 4294901760
      %1660 = vmatmul.mubr.f32.gmra.mrb[0].mxu0 %v1659
      %v1661 = vpop.f32.mrb[0].mxu0
      %v1662 = vadd.f32 %v1557, %v1661
      %v1663 = vpop.f32.mrb[0].mxu0
      %1664 = vmatprep.mubr.f32.mxu0 0.0
      %v1665 = vand.u32 %v1151, 4294901760
      %1666 = vmatmul.mubr.f32.gmra.mrb[0].mxu0 %v1665
      %v1667 = vpop.f32.mrb[0].mxu0
      %v1668 = vadd.f32 %v1565, %v1667
      %v1669 = vpop.f32.mrb[0].mxu0
      %1670 = vmatprep.mubr.f32.mxu0 0.0
      %v1671 = vand.u32 %v1154, 4294901760
      %1672 = vmatmul.mubr.f32.gmra.mrb[0].mxu0 %v1671
      %v1673 = vpop.f32.mrb[0].mxu0
      %v1674 = vadd.f32 %v1573, %v1673
      %v1675 = vpop.f32.mrb[0].mxu0
      %1676 = vdwg.mxu0
      %1677 = vmatprep.subr.mxu0 0.0
      %v1678 = vand.u32 %v1112, 4294901760
      %1679 = vmatpush1.msra.mxu0 %v1678
      %1680 = vmatprep.subr.mxu0 0.0
      %v1681 = vand.u32 %v1113, 4294901760
      %1682 = vmatpush1.msra.mxu0 %v1681
      %1683 = vmatprep.subr.mxu0 0.0
      %v1684 = vand.u32 %v1114, 4294901760
      %1685 = vmatpush1.msra.mxu0 %v1684
      %1686 = vmatprep.subr.mxu0 0.0
      %v1687 = vand.u32 %v1115, 4294901760
      %1688 = vmatpush1.msra.mxu0 %v1687
      %1689 = vmatprep.subr.mxu0 0.0
      %1690 = vmatpush1.msra.mxu0 0.0
      %1691 = vmatprep.subr.mxu0 0.0
      %1692 = vmatpush1.msra.mxu0 0.0
      %1693 = vmatprep.subr.mxu0 0.0
      %1694 = vmatpush1.msra.mxu0 0.0
      %1695 = vmatprep.subr.mxu0 0.0
      %1696 = vmatpush1.msra.mxu0 0.0
      %1697 = vmatprep.subr.mxu0 0.0
      %1698 = vmatpush1.msra.mxu0 0.0
      %1699 = vmatprep.subr.mxu0 0.0
      %1700 = vmatpush1.msra.mxu0 0.0
      %1701 = vmatprep.subr.mxu0 0.0
      %1702 = vmatpush1.msra.mxu0 0.0
      %1703 = vmatprep.subr.mxu0 0.0
      %1704 = vmatpush1.msra.mxu0 0.0
      %1705 = vmatprep.subr.mxu0 0.0
      %1706 = vmatpush1.msra.mxu0 0.0
      %1707 = vmatprep.subr.mxu0 0.0
      %1708 = vmatpush1.msra.mxu0 0.0
      %1709 = vmatprep.subr.mxu0 0.0
      %1710 = vmatpush1.msra.mxu0 0.0
      %1711 = vmatprep.subr.mxu0 0.0
      %1712 = vmatpush1.msra.mxu0 0.0
      %1713 = vmatprep.subr.mxu0 0.0
      %1714 = vmatpush1.msra.mxu0 0.0
      %1715 = vmatprep.subr.mxu0 0.0
      %1716 = vmatpush1.msra.mxu0 0.0
      %1717 = vmatprep.subr.mxu0 0.0
      %1718 = vmatpush1.msra.mxu0 0.0
      %1719 = vmatprep.subr.mxu0 0.0
      %1720 = vmatpush1.msra.mxu0 0.0
      %1721 = vmatprep.subr.mxu0 0.0
      %1722 = vmatpush1.msra.mxu0 0.0
      %1723 = vmatprep.subr.mxu0 0.0
      %1724 = vmatpush1.msra.mxu0 0.0
      %1725 = vmatprep.subr.mxu0 0.0
      %1726 = vmatpush1.msra.mxu0 0.0
      %1727 = vmatprep.subr.mxu0 0.0
      %1728 = vmatpush1.msra.mxu0 0.0
      %1729 = vmatprep.subr.mxu0 0.0
      %1730 = vmatpush1.msra.mxu0 0.0
      %1731 = vmatprep.subr.mxu0 0.0
      %1732 = vmatpush1.msra.mxu0 0.0
      %1733 = vmatprep.subr.mxu0 0.0
      %1734 = vmatpush1.msra.mxu0 0.0
      %1735 = vmatprep.subr.mxu0 0.0
      %1736 = vmatpush1.msra.mxu0 0.0
      %1737 = vmatprep.subr.mxu0 0.0
      %1738 = vmatpush1.msra.mxu0 0.0
      %1739 = vmatprep.subr.mxu0 0.0
      %1740 = vmatpush1.msra.mxu0 0.0
      %1741 = vmatprep.subr.mxu0 0.0
      %1742 = vmatpush1.msra.mxu0 0.0
      %1743 = vmatprep.subr.mxu0 0.0
      %1744 = vmatpush1.msra.mxu0 0.0
      %1745 = vmatprep.mubr.f32.mxu0 0.0
      %v1746 = vand.u32 %v1145, 4294901760
      %1747 = vmatmul.mubr.f32.gmra.mrb[0].mxu0 %v1746
      %v1748 = vpop.f32.mrb[0].mxu0
      %v1749 = vadd.f32 %v1656, %v1748
      %v1750 = vpop.f32.mrb[0].mxu0
      %1751 = vmatprep.mubr.f32.mxu0 0.0
      %v1752 = vand.u32 %v1148, 4294901760
      %1753 = vmatmul.mubr.f32.gmra.mrb[0].mxu0 %v1752
      %v1754 = vpop.f32.mrb[0].mxu0
      %v1755 = vadd.f32 %v1662, %v1754
      %v1756 = vpop.f32.mrb[0].mxu0
      %1757 = vmatprep.mubr.f32.mxu0 0.0
      %v1758 = vand.u32 %v1151, 4294901760
      %1759 = vmatmul.mubr.f32.gmra.mrb[0].mxu0 %v1758
      %v1760 = vpop.f32.mrb[0].mxu0
      %v1761 = vadd.f32 %v1668, %v1760
      %v1762 = vpop.f32.mrb[0].mxu0
      %1763 = vmatprep.mubr.f32.mxu0 0.0
      %v1764 = vand.u32 %v1154, 4294901760
      %1765 = vmatmul.mubr.f32.gmra.mrb[0].mxu0 %v1764
      %v1766 = vpop.f32.mrb[0].mxu0
      %v1767 = vadd.f32 %v1674, %v1766
      %v1768 = vpop.f32.mrb[0].mxu0
      %1769 = vdwg.mxu0
      %v1770 = vtanh.pop %v1749
      %v1771 = vtanh.pop %v1755
      %v1772 = vtanh.pop %v1761
      %v1773 = vtanh.pop %v1767
      %v1774 = vld [vmem:[%s8] sm:$0xff]
      %v1775 = vld [vmem:[%s8 + $0x8] sm:$0xff]
      %v1776 = vld [vmem:[%s8 + $0x10] sm:$0xff]
      %v1777 = vld [vmem:[%s8 + $0x18] sm:$0xff]
      %1779 = vset.pattern.permute.xlu0 0
      %1780 = vperm.xlu0 %1779, %v1774
      %v1781 = vpop.permute.xlu0 %1780
      %1784 = vset.pattern.permute.xlu0 0
      %1785 = vperm.xlu0 %1784, %v1775
      %v1786 = vpop.permute.xlu0 %1785
      %1789 = vset.pattern.permute.xlu0 0
      %1790 = vperm.xlu0 %1789, %v1776
      %v1791 = vpop.permute.xlu0 %1790
      %1794 = vset.pattern.permute.xlu0 0
      %1795 = vperm.xlu0 %1794, %v1777
      %v1796 = vpop.permute.xlu0 %1795
      %v1798 = vmul.f32 %v1781, %v1770
      %v1799 = vmul.f32 %v1786, %v1771
      %v1800 = vmul.f32 %v1791, %v1772
      %v1801 = vmul.f32 %v1796, %v1773
      %v1802 = vadd.f32 %v1798, %v1799
      %v1803 = vadd.f32 %v1802, %v1800
      %v1804 = vadd.f32 %v1803, %v1801
      %v1805 = vrot.slane %v1804, 4
      %v1806 = vadd.f32 %v1804, %v1805
      %v1807 = vrot.slane %v1806, 2
      %v1808 = vadd.f32 %v1806, %v1807
      %v1809 = vrot.slane %v1808, 1
      %v1810 = vadd.f32 %v1808, %v1809
      %v1811 = vld [vmem:[#allocation2] sm:$0x1]
      %1813 = vset.pattern.permute.xlu0 0
      %1814 = vperm.xlu0 %1813, %v1811
      %v1815 = vpop.permute.xlu0 %1814
      %v1817 = vlaneseq
      %v1818 = vshrl.u32 %v1817, 7
      %v1819 = vsub.s32 0, %v1818
      %v1820 = vrot.slane %v1815, %v1819
      %v1821 = vadd.f32 %v1810, %v1820
      %1822 = vst [vmem:[%s354] sm:$0x1] %v1821
      %p1823 = scmp.lt.s32.totalorder %s23, 1
      %s1824 = scalar_select %p1823, %s23, 1
      %s1825 = scalar_lea.vmem %s10, %s1824
      // Predicated region
      $region61: #{_pinn_forward_jit.1} parent=59 // pred_check
        %p1826 = pneg %p256
      $region62: #{_pinn_forward_jit.1} parent=59 // pred_check_branch
        %1828 = sbr.rel (%p1826) target = $region64
      $region63: #{_pinn_forward_jit.1} parent=59 // pred_region
        _
      $region64: #{_pinn_forward_jit.1} parent=59 // pred_fallthru
        _
    $region60: #{_pinn_forward_jit.1} parent=5 // pred_fallthru
      _
    %p1829 = scmp.le.s32.totalorder 2, %s18
    // Predicated region
    $region65: #{_pinn_forward_jit.1} parent=5 // pred_check
      %p1830 = pneg %p1829
    $region66: #{_pinn_forward_jit.1} parent=5 // pred_check_branch
      %1832 = sbr.rel (%p1830) target = $region68
    $region67: #{_pinn_forward_jit.1} parent=5 // pred_region
      %s1833 = ssub.s32 %s18, 2
      // Predicated region
      $region69: #{_pinn_forward_jit.1} parent=67 // pred_check
        %p1834 = pneg %p262
      $region70: #{_pinn_forward_jit.1} parent=67 // pred_check_branch
        %1836 = sbr.rel (%p1834) target = $region72
      $region71: #{_pinn_forward_jit.1} parent=67 // pred_region
        %p1837 = scmp.lt.s32.totalorder %s24, 1
        %s1838 = scalar_select %p1837, %s24, 1
        %s1839 = scalar_lea.vmem %s10, %s1838
      $region72: #{_pinn_forward_jit.1} parent=67 // pred_fallthru
        _
    $region68: #{_pinn_forward_jit.1} parent=5 // pred_fallthru
      _
  $region6: #{_pinn_forward_jit.1} parent=0 // loop_footer
    %s22 = sadd.s32 1, %s18
  $region7: #{_pinn_forward_jit.1} parent=0 // loop_footer_branch
    %17 = sbr.rel target = $region3
  $region8: #{_pinn_forward_jit.1} parent=0 // loop_exit
    _

</llo_original>
